<compile_context>
chip_gen: v5e
topology: v5e:2x2
jax: 0.10.0
libtpu: 0.0.40
codegen_flags: <defaults>
</compile_context>

<pallas_src>
import functools

import jax
import jax.numpy as jnp
from jax.experimental import pallas as pl
from jax.experimental.pallas import tpu as pltpu


def _round_up(n, m):
    return pl.cdiv(n, m) * m


def _pad_to(a, axis, target):
    if a.shape[axis] == target:
        return a
    widths = [(0, 0)] * a.ndim
    widths[axis] = (0, target - a.shape[axis])
    return jnp.pad(a, widths)


def _vmem_limit_bytes():
    # v5e/v6e have 128 MiB VMEM per TensorCore, v7x only 64 MiB.  Give the
    # pipeline roughly half of whatever is physically present.
    try:
        cap = int(pltpu.get_tpu_info().vmem_capacity_bytes)
    except Exception:
        cap = 64 * 1024 * 1024
    return int(max(32 * 1024 * 1024, min(cap // 2, 96 * 1024 * 1024)))


def _pick_tile(total, candidates):
    for c in candidates:
        if total % c == 0:
            return c
    return total


# ---------------------------------------------------------------------------
# Linear (matmul + bias) kernel, tiled over rows and output features.
# ---------------------------------------------------------------------------
def _linear_kernel(x_ref, w_ref, b_ref, o_ref):
    acc = jnp.dot(x_ref[...], w_ref[...], preferred_element_type=jnp.float32)
    o_ref[...] = (acc + b_ref[...]).astype(o_ref.dtype)


def linear_pallas(x2d, w, b=None, *, out_dtype=jnp.float32, tm=512):
    """y = x2d @ w (+ b).  x2d: (M, K), w: (K, Nout), b: (1, Nout) or None.

    Grid = (feature tiles, row tiles): the (K, tn) weight tile stays resident
    across the whole inner row sweep; only the x row tile and the (tm, tn)
    output tile stream.  Both axes are "parallel" for megacore sharding.
    """
    M, K = x2d.shape
    Kw, Nout = w.shape
    assert K == Kw

    # Row tile: multiple of 8 sublanes; make sure there are >=2 row tiles when
    # M allows so both v7x TensorCores get work.
    tm = min(tm, _round_up(pl.cdiv(M, 2), 8))
    tm = max(tm, 8)
    Mp = _round_up(M, tm)

    # Output-feature tile (lane-dense, divides Nout).
    tn = _pick_tile(Nout, (1024, 512, 384, 256, 128)) if Nout % 128 == 0 else Nout

    xp = _pad_to(x2d, 0, Mp)
    if b is None:
        b = jnp.zeros((1, Nout), jnp.float32)

    cost = pl.CostEstimate(
        flops=2 * Mp * K * Nout,
        transcendentals=0,
        bytes_accessed=(xp.size * xp.dtype.itemsize
                        + w.size * w.dtype.itemsize
                        + b.size * b.dtype.itemsize
                        + Mp * Nout * jnp.dtype(out_dtype).itemsize),
    )

    out = pl.pallas_call(
        _linear_kernel,
        out_shape=jax.ShapeDtypeStruct((Mp, Nout), out_dtype),
        grid_spec=pltpu.PrefetchScalarGridSpec(
            num_scalar_prefetch=0,
            grid=(Nout // tn, Mp // tm),                       # inner axis = rows
            in_specs=[
                pl.BlockSpec((tm, K), lambda j, i: (i, 0)),    # x row tile (streams)
                pl.BlockSpec((K, tn), lambda j, i: (0, j)),    # weight tile (resident over i)
                pl.BlockSpec((1, tn), lambda j, i: (0, j)),    # bias tile   (resident over i)
            ],
            out_specs=pl.BlockSpec((tm, tn), lambda j, i: (i, j)),
        ),
        compiler_params=pltpu.CompilerParams(
            dimension_semantics=("parallel", "parallel"),
            vmem_limit_bytes=_vmem_limit_bytes(),
        ),
        cost_estimate=cost,
    )(xp, w, b)

    return out[:M] if Mp != M else out


# ---------------------------------------------------------------------------
# Flash-style attention: grid = (batch, kv block).  q/k/v read straight out of
# the (B, Np, 3*Ep) qkv activation; output is a merged (Np, Ep) slab.
# ---------------------------------------------------------------------------
def _attention_kernel(q_ref, k_ref, v_ref, o_ref, m_sc, l_sc, acc_sc, *,
                      num_heads, head_dim, scale, seq_len, kv_block, mask_keys):
    j = pl.program_id(1)
    H, D = num_heads, head_dim
    E = H * D
    Nq, Ep = o_ref.shape

    @pl.when(j == 0)
    def _init():
        m_sc[...] = jnp.full_like(m_sc, -jnp.inf)
        l_sc[...] = jnp.zeros_like(l_sc)
        acc_sc[...] = jnp.zeros_like(acc_sc)

    for h in range(H):
        # Scale folded into q: O(N*D) multiplies instead of O(N*N).
        qh = q_ref[:, h * D:(h + 1) * D] * scale            # (Nq, D)  bf16
        kh = k_ref[:, h * D:(h + 1) * D]                    # (tk, D)  bf16
        vh = v_ref[:, h * D:(h + 1) * D]                    # (tk, D)  bf16

        s = jax.lax.dot_general(qh, kh, (((1,), (1,)), ((), ())),
                                preferred_element_type=jnp.float32)   # (Nq, tk)
        if mask_keys:   # only traced when the kv length was padded
            key_idx = j * kv_block + jax.lax.broadcasted_iota(jnp.int32, s.shape, 1)
            s = jnp.where(key_idx < seq_len, s, -jnp.inf)

        m_prev = m_sc[:, h:h + 1]
        l_prev = l_sc[:, h:h + 1]
        m_new = jnp.maximum(m_prev, jnp.max(s, axis=-1, keepdims=True))
        alpha = jnp.exp(m_prev - m_new)
        p = jnp.exp(s - m_new)                               # unnormalized probs
        l_sc[:, h:h + 1] = alpha * l_prev + jnp.sum(p, axis=-1, keepdims=True)
        pv = jnp.dot(p.astype(vh.dtype), vh, preferred_element_type=jnp.float32)
        acc_sc[:, h * D:(h + 1) * D] = alpha * acc_sc[:, h * D:(h + 1) * D] + pv
        m_sc[:, h:h + 1] = m_new

    @pl.when(j == pl.num_programs(1) - 1)
    def _finalize():
        # Deferred normalization on the (Nq, D) output; reciprocal on the EUP.
        parts = []
        for h in range(H):
            inv = pl.reciprocal(l_sc[:, h:h + 1], approx=True)
            parts.append((acc_sc[:, h * D:(h + 1) * D] * inv).astype(o_ref.dtype))
        if Ep > E:
            parts.append(jnp.zeros((Nq, Ep - E), o_ref.dtype))
        o_ref[...] = jnp.concatenate(parts, axis=-1)         # one lane-dense store


def attention_pallas(qkv, *, num_heads, head_dim, seq_len, padded_embed, scale,
                     out_dtype, max_kv_block=512):
    """qkv: (B, N, 3*Ep) with column layout [q|pad][k|pad][v|pad], head-major."""
    B, N, three_ep = qkv.shape
    Ep = padded_embed
    assert three_ep == 3 * Ep

    if N <= max_kv_block:
        kv_block, Np = N, N                 # single KV block, no padding needed
    else:
        kv_block = max_kv_block
        Np = _round_up(N, kv_block)
        qkv = _pad_to(qkv, 1, Np)           # zero-padded keys get masked to -inf
    num_kv = Np // kv_block
    mask_keys = Np != N

    kernel = functools.partial(
        _attention_kernel, num_heads=num_heads, head_dim=head_dim, scale=scale,
        seq_len=N, kv_block=kv_block, mask_keys=mask_keys)

    H, D = num_heads, head_dim
    cost = pl.CostEstimate(
        flops=4 * B * H * Np * Np * D,
        transcendentals=B * H * Np * Np,
        bytes_accessed=(qkv.size * qkv.dtype.itemsize
                        + B * Np * Ep * jnp.dtype(out_dtype).itemsize),
    )

    out = pl.pallas_call(
        kernel,
        out_shape=jax.ShapeDtypeStruct((B, Np, Ep), out_dtype),
        grid_spec=pltpu.PrefetchScalarGridSpec(
            num_scalar_prefetch=0,
            grid=(B, num_kv),
            in_specs=[
                # Three views of the same qkv activation; the last-dim block
                # index (0/1/2) selects the q/k/v slab -> no HBM head-split.
                pl.BlockSpec((None, Np, Ep), lambda b, j: (b, 0, 0)),        # q (resident over j)
                pl.BlockSpec((None, kv_block, Ep), lambda b, j: (b, j, 1)),  # k tile
                pl.BlockSpec((None, kv_block, Ep), lambda b, j: (b, j, 2)),  # v tile
            ],
            out_specs=pl.BlockSpec((None, Np, Ep), lambda b, j: (b, 0, 0)),
            scratch_shapes=[
                pltpu.VMEM((Np, num_heads), jnp.float32),   # running max  m
                pltpu.VMEM((Np, num_heads), jnp.float32),   # running sum  l
                pltpu.VMEM((Np, Ep), jnp.float32),          # unnormalized PV accumulator
            ],
        ),
        compiler_params=pltpu.CompilerParams(
            dimension_semantics=("parallel", "arbitrary"),
            vmem_limit_bytes=_vmem_limit_bytes(),
        ),
        cost_estimate=cost,
    )(qkv, qkv, qkv)

    return out[:, :N, :] if Np != N else out


# ---------------------------------------------------------------------------
# One-time weight layout prep + the full module forward.
# ---------------------------------------------------------------------------
def prepare_params(w_qkv, w_out, b_out, *, compute_dtype=jnp.bfloat16):
    """Hoisted transpose + pad + cast of the weights (done once, not per call).

    w_qkv: (3E, E) PyTorch nn.Linear weight (no bias); w_out: (E, E); b_out: (E,).
    """
    _, E = w_qkv.shape
    Ep = _round_up(E, 128)
    # (E, 3E) -> (E, 3, E) -> pad each q/k/v column slab to Ep -> (E, 3*Ep).
    wq = w_qkv.T.reshape(E, 3, E)
    wq = jnp.pad(wq, ((0, 0), (0, 0), (0, Ep - E))).reshape(E, 3 * Ep)
    w_qkv_p = wq.astype(compute_dtype)
    # fc_out: (E, E) -> (Ep, Ep): padded input rows meet the zero-padded
    # attention columns; padded output columns are sliced off at the end.
    w_out_p = jnp.pad(w_out.T, ((0, Ep - E), (0, Ep - E))).astype(compute_dtype)
    b_out_p = jnp.pad(b_out, (0, Ep - E)).reshape(1, Ep).astype(jnp.float32)
    return w_qkv_p, w_out_p, b_out_p


@functools.partial(jax.jit, static_argnames=("num_heads",))
def multi_head_self_attention(x, w_qkv_p, w_out_p, b_out_p, num_heads):
    """Forward of CustomMultiHeadSelfAttention.  x: (B, N, E) float32."""
    B, N, E = x.shape
    H = num_heads
    D = E // H
    Ep = w_out_p.shape[0]
    scale = float(D) ** -0.5
    cdt = w_qkv_p.dtype              # bf16 operands, f32 accumulation in-kernel

    # 1) QKV projection (no bias).
    x2d = x.reshape(B * N, E).astype(cdt)
    qkv = linear_pallas(x2d, w_qkv_p, None, out_dtype=cdt)        # (B*N, 3*Ep)

    # 2) Attention straight off the qkv activation; output already head-merged.
    qkv = qkv.reshape(B, N, 3 * Ep)                               # free reshape
    attn = attention_pallas(qkv, num_heads=H, head_dim=D, seq_len=N,
                            padded_embed=Ep, scale=scale, out_dtype=cdt)

    # 3) Output projection with bias, back to the input dtype.
    out = linear_pallas(attn.reshape(B * N, Ep), w_out_p, b_out_p,
                        out_dtype=x.dtype)                        # (B*N, Ep)
    return out[:, :E].reshape(B, N, E)


if __name__ == "__main__":
    # Small shapes consistent with the module: batch=2, tokens=8, embed=32, heads=4.
    B, N, E, H = 2, 8, 32, 4
    D = E // H

    key = jax.random.PRNGKey(0)
    kx, kq, ko, kb = jax.random.split(key, 4)
    x = jax.random.normal(kx, (B, N, E), dtype=jnp.float32)
    w_qkv = jax.random.normal(kq, (3 * E, E), dtype=jnp.float32) * 0.02
    w_out = jax.random.normal(ko, (E, E), dtype=jnp.float32) * 0.02
    b_out = jax.random.normal(kb, (E,), dtype=jnp.float32) * 0.02

    params = prepare_params(w_qkv, w_out, b_out)      # one-time layout prep
    out = multi_head_self_attention(x, *params, num_heads=H)
    out = jax.block_until_ready(out)

    # Pure-f32 reference matching the PyTorch module exactly.
    scale = D ** -0.5
    qkv_ref = (x @ w_qkv.T).reshape(B, N, 3, H, D)
    q_r, k_r, v_r = jnp.transpose(qkv_ref, (2, 0, 3, 1, 4))
    s_r = jnp.einsum("bhqd,bhkd->bhqk", q_r, k_r) * scale
    p_r = jax.nn.softmax(s_r, axis=-1)
    o_r = jnp.einsum("bhqk,bhkd->bhqd", p_r, v_r)
    o_r = jnp.transpose(o_r, (0, 2, 1, 3)).reshape(B, N, E)
    ref = o_r @ w_out.T + b_out

    assert out.shape == (B, N, E), out.shape
    max_err = float(jnp.max(jnp.abs(out - ref)))
    assert jnp.allclose(out, ref, atol=2e-2, rtol=2e-2), max_err
    print("KERNEL_OK")
</pallas_src>

<mosaic_0001>
module attributes {stable_mosaic.version = 11 : i64} {
  func.func @_linear_kernel(%arg0: i32, %arg1: i32, %arg2: memref<8x32xbf16, #tpu.memory_space<vmem>>, %arg3: memref<32x384xbf16, #tpu.memory_space<vmem>>, %arg4: memref<1x384xf32, #tpu.memory_space<vmem>>, %arg5: memref<8x384xbf16, #tpu.memory_space<vmem>>) attributes {dimension_semantics = [#tpu.dimension_semantics<parallel>, #tpu.dimension_semantics<parallel>], iteration_bounds = array<i64: 1, 2>, scalar_prefetch = 0 : i64, scratch_operands = 0 : i64, tpu.core_type = #tpu.core_type<tc>, window_params = [{transform_indices = @transform_0, window_bounds = array<i64: 8, 32>}, {transform_indices = @transform_1, window_bounds = array<i64: 32, 384>}, {transform_indices = @transform_2, window_bounds = array<i64: 1, 384>}, {transform_indices = @transform_3, window_bounds = array<i64: 8, 384>}]} {
    %c0 = arith.constant 0 : index
    %c0_0 = arith.constant 0 : index
    %0 = vector.load %arg2[%c0, %c0_0] : memref<8x32xbf16, #tpu.memory_space<vmem>>, vector<8x32xbf16>
    %c0_1 = arith.constant 0 : index
    %c0_2 = arith.constant 0 : index
    %1 = vector.load %arg3[%c0_1, %c0_2] : memref<32x384xbf16, #tpu.memory_space<vmem>>, vector<32x384xbf16>
    %cst = arith.constant dense<0.000000e+00> : vector<8x384xf32>
    %2 = tpu.matmul %0, %1, %cst {dimension_numbers = #tpu.dot_dimension_numbers<[1], [0], [0], [1], [0, 0, 1, 1], [], []>} : vector<8x32xbf16>, vector<32x384xbf16>, vector<8x384xf32> -> vector<8x384xf32>
    %c0_3 = arith.constant 0 : index
    %c0_4 = arith.constant 0 : index
    %3 = vector.load %arg4[%c0_3, %c0_4] : memref<1x384xf32, #tpu.memory_space<vmem>>, vector<1x384xf32>
    %4 = vector.broadcast %3 : vector<1x384xf32> to vector<8x384xf32>
    %5 = arith.addf %2, %4 : vector<8x384xf32>
    %6 = arith.truncf %5 : vector<8x384xf32> to vector<8x384xbf16>
    %c0_5 = arith.constant 0 : index
    %c0_6 = arith.constant 0 : index
    %7 = vector.load %arg5[%c0_5, %c0_6] : memref<8x384xbf16, #tpu.memory_space<vmem>>, vector<8x384xbf16>
    tpu.vector_store %arg5[%c0_5, %c0_6], %6 {strides = array<i32>} : memref<8x384xbf16, #tpu.memory_space<vmem>>, vector<8x384xbf16>,
    return
  }
  func.func @transform_0(%arg0: i32, %arg1: i32) -> (i32, i32) {
    %c0_i32 = arith.constant 0 : i32
    %c0_i32_0 = arith.constant 0 : i32
    return %arg1, %c0_i32 : i32, i32
  }
  func.func @transform_1(%arg0: i32, %arg1: i32) -> (i32, i32) {
    %c0_i32 = arith.constant 0 : i32
    %c0_i32_0 = arith.constant 0 : i32
    return %c0_i32, %arg0 : i32, i32
  }
  func.func @transform_2(%arg0: i32, %arg1: i32) -> (i32, i32) {
    %c0_i32 = arith.constant 0 : i32
    %c0_i32_0 = arith.constant 0 : i32
    return %c0_i32, %arg0 : i32, i32
  }
  func.func @transform_3(%arg0: i32, %arg1: i32) -> (i32, i32) {
    %c0_i32 = arith.constant 0 : i32
    return %arg1, %arg0 : i32, i32
  }
}

module attributes {stable_mosaic.version = 11 : i64} {
  func.func @_attention_kernel(%arg0: i32, %arg1: i32, %arg2: memref<1x8x128xbf16, #tpu.memory_space<vmem>>, %arg3: memref<1x8x128xbf16, #tpu.memory_space<vmem>>, %arg4: memref<1x8x128xbf16, #tpu.memory_space<vmem>>, %arg5: memref<1x8x128xbf16, #tpu.memory_space<vmem>>, %arg6: memref<8x4xf32, #tpu.memory_space<vmem>>, %arg7: memref<8x4xf32, #tpu.memory_space<vmem>>, %arg8: memref<8x128xf32, #tpu.memory_space<vmem>>) attributes {dimension_semantics = [#tpu.dimension_semantics<parallel>, #tpu.dimension_semantics<arbitrary>], iteration_bounds = array<i64: 2, 1>, scalar_prefetch = 0 : i64, scratch_operands = 3 : i64, tpu.core_type = #tpu.core_type<tc>, window_params = [{transform_indices = @transform_0, window_bounds = array<i64: 1, 8, 128>}, {transform_indices = @transform_1, window_bounds = array<i64: 1, 8, 128>}, {transform_indices = @transform_2, window_bounds = array<i64: 1, 8, 128>}, {transform_indices = @transform_3, window_bounds = array<i64: 1, 8, 128>}]} {
    %c0_i32 = arith.constant 0 : i32
    %0 = arith.cmpi eq, %arg1, %c0_i32 : i32
    %1 = arith.extui %0 : i1 to i32
    %c0_i32_0 = arith.constant 0 : i32
    %2 = arith.cmpi ne, %1, %c0_i32_0 : i32
    scf.if %2 {
      %cst_99 = arith.constant 0xFF800000 : f32
      %134 = vector.broadcast %cst_99 : f32 to vector<8x4xf32>
      %c0_100 = arith.constant 0 : index
      %c0_101 = arith.constant 0 : index
      %135 = vector.load %arg6[%c0_100, %c0_101] : memref<8x4xf32, #tpu.memory_space<vmem>>, vector<8x4xf32>
      tpu.vector_store %arg6[%c0_100, %c0_101], %134 {strides = array<i32>} : memref<8x4xf32, #tpu.memory_space<vmem>>, vector<8x4xf32>,
      %cst_102 = arith.constant 0.000000e+00 : f32
      %136 = vector.broadcast %cst_102 : f32 to vector<8x4xf32>
      %c0_103 = arith.constant 0 : index
      %c0_104 = arith.constant 0 : index
      %137 = vector.load %arg7[%c0_103, %c0_104] : memref<8x4xf32, #tpu.memory_space<vmem>>, vector<8x4xf32>
      tpu.vector_store %arg7[%c0_103, %c0_104], %136 {strides = array<i32>} : memref<8x4xf32, #tpu.memory_space<vmem>>, vector<8x4xf32>,
      %cst_105 = arith.constant 0.000000e+00 : f32
      %138 = vector.broadcast %cst_105 : f32 to vector<8x128xf32>
      %c0_106 = arith.constant 0 : index
      %c0_107 = arith.constant 0 : index
      %139 = vector.load %arg8[%c0_106, %c0_107] : memref<8x128xf32, #tpu.memory_space<vmem>>, vector<8x128xf32>
      tpu.vector_store %arg8[%c0_106, %c0_107], %138 {strides = array<i32>} : memref<8x128xf32, #tpu.memory_space<vmem>>, vector<8x128xf32>,
    } else {
    }
    %c0 = arith.constant 0 : index
    %c0_1 = arith.constant 0 : index
    %c0_2 = arith.constant 0 : index
    %3 = vector.load %arg2[%c0, %c0_1, %c0_2] : memref<1x8x128xbf16, #tpu.memory_space<vmem>>, vector<1x8x8xbf16>
    %4 = vector.shape_cast %3 : vector<1x8x8xbf16> to vector<8x8xbf16>
    %cst = arith.constant 3.535160e-01 : bf16
    %5 = vector.broadcast %cst : bf16 to vector<8x8xbf16>
    %6 = arith.mulf %4, %5 : vector<8x8xbf16>
    %c0_3 = arith.constant 0 : index
    %c0_4 = arith.constant 0 : index
    %c0_5 = arith.constant 0 : index
    %7 = vector.load %arg3[%c0_3, %c0_4, %c0_5] : memref<1x8x128xbf16, #tpu.memory_space<vmem>>, vector<1x8x8xbf16>
    %8 = vector.shape_cast %7 : vector<1x8x8xbf16> to vector<8x8xbf16>
    %c0_6 = arith.constant 0 : index
    %c0_7 = arith.constant 0 : index
    %c0_8 = arith.constant 0 : index
    %9 = vector.load %arg4[%c0_6, %c0_7, %c0_8] : memref<1x8x128xbf16, #tpu.memory_space<vmem>>, vector<1x8x8xbf16>
    %10 = vector.shape_cast %9 : vector<1x8x8xbf16> to vector<8x8xbf16>
    %cst_9 = arith.constant dense<0.000000e+00> : vector<8x8xf32>
    %11 = tpu.matmul %6, %8, %cst_9 {dimension_numbers = #tpu.dot_dimension_numbers<[1], [1], [0], [0], [0, 0, 1, 0], [], []>} : vector<8x8xbf16>, vector<8x8xbf16>, vector<8x8xf32> -> vector<8x8xf32>
    %c0_10 = arith.constant 0 : index
    %c0_11 = arith.constant 0 : index
    %12 = vector.load %arg6[%c0_10, %c0_11] : memref<8x4xf32, #tpu.memory_space<vmem>>, vector<8x1xf32>
    %c0_12 = arith.constant 0 : index
    %c0_13 = arith.constant 0 : index
    %13 = vector.load %arg7[%c0_12, %c0_13] : memref<8x4xf32, #tpu.memory_space<vmem>>, vector<8x1xf32>
    %cst_14 = arith.constant dense<0xFF800000> : vector<8xf32>
    %14 = vector.multi_reduction <maximumf>, %11, %cst_14 [1] : vector<8x8xf32> to vector<8xf32>
    %15 = vector.shape_cast %14 : vector<8xf32> to vector<8x1xf32>
    %16 = arith.maximumf %12, %15 : vector<8x1xf32>
    %17 = arith.subf %12, %16 : vector<8x1xf32>
    %18 = math.exp %17 : vector<8x1xf32>
    %19 = vector.broadcast %16 : vector<8x1xf32> to vector<8x8xf32>
    %20 = arith.subf %11, %19 : vector<8x8xf32>
    %21 = math.exp %20 : vector<8x8xf32>
    %22 = arith.mulf %18, %13 : vector<8x1xf32>
    %cst_15 = arith.constant dense<0.000000e+00> : vector<8xf32>
    %23 = vector.multi_reduction <add>, %21, %cst_15 [1] : vector<8x8xf32> to vector<8xf32>
    %24 = vector.shape_cast %23 : vector<8xf32> to vector<8x1xf32>
    %25 = arith.addf %22, %24 : vector<8x1xf32>
    %c0_16 = arith.constant 0 : index
    %c0_17 = arith.constant 0 : index
    %26 = vector.load %arg7[%c0_16, %c0_17] : memref<8x4xf32, #tpu.memory_space<vmem>>, vector<8x1xf32>
    tpu.vector_store %arg7[%c0_16, %c0_17], %25 {strides = array<i32>} : memref<8x4xf32, #tpu.memory_space<vmem>>, vector<8x1xf32>,
    %27 = arith.truncf %21 : vector<8x8xf32> to vector<8x8xbf16>
    %cst_18 = arith.constant dense<0.000000e+00> : vector<8x8xf32>
    %28 = tpu.matmul %27, %10, %cst_18 {dimension_numbers = #tpu.dot_dimension_numbers<[1], [0], [0], [1], [0, 0, 1, 1], [], []>} : vector<8x8xbf16>, vector<8x8xbf16>, vector<8x8xf32> -> vector<8x8xf32>
    %c0_19 = arith.constant 0 : index
    %c0_20 = arith.constant 0 : index
    %29 = vector.load %arg8[%c0_19, %c0_20] : memref<8x128xf32, #tpu.memory_space<vmem>>, vector<8x8xf32>
    %30 = vector.broadcast %18 : vector<8x1xf32> to vector<8x8xf32>
    %31 = arith.mulf %30, %29 : vector<8x8xf32>
    %32 = arith.addf %31, %28 : vector<8x8xf32>
    %c0_21 = arith.constant 0 : index
    %c0_22 = arith.constant 0 : index
    %33 = vector.load %arg8[%c0_21, %c0_22] : memref<8x128xf32, #tpu.memory_space<vmem>>, vector<8x8xf32>
    tpu.vector_store %arg8[%c0_21, %c0_22], %32 {strides = array<i32>} : memref<8x128xf32, #tpu.memory_space<vmem>>, vector<8x8xf32>,
    %c0_23 = arith.constant 0 : index
    %c0_24 = arith.constant 0 : index
    %34 = vector.load %arg6[%c0_23, %c0_24] : memref<8x4xf32, #tpu.memory_space<vmem>>, vector<8x1xf32>
    tpu.vector_store %arg6[%c0_23, %c0_24], %16 {strides = array<i32>} : memref<8x4xf32, #tpu.memory_space<vmem>>, vector<8x1xf32>,
    %c0_25 = arith.constant 0 : index
    %c0_26 = arith.constant 0 : index
    %c8 = arith.constant 8 : index
    %35 = vector.load %arg2[%c0_25, %c0_26, %c8] : memref<1x8x128xbf16, #tpu.memory_space<vmem>>, vector<1x8x8xbf16>
    %36 = vector.shape_cast %35 : vector<1x8x8xbf16> to vector<8x8xbf16>
    %cst_27 = arith.constant 3.535160e-01 : bf16
    %37 = vector.broadcast %cst_27 : bf16 to vector<8x8xbf16>
    %38 = arith.mulf %36, %37 : vector<8x8xbf16>
    %c0_28 = arith.constant 0 : index
    %c0_29 = arith.constant 0 : index
    %c8_30 = arith.constant 8 : index
    %39 = vector.load %arg3[%c0_28, %c0_29, %c8_30] : memref<1x8x128xbf16, #tpu.memory_space<vmem>>, vector<1x8x8xbf16>
    %40 = vector.shape_cast %39 : vector<1x8x8xbf16> to vector<8x8xbf16>
    %c0_31 = arith.constant 0 : index
    %c0_32 = arith.constant 0 : index
    %c8_33 = arith.constant 8 : index
    %41 = vector.load %arg4[%c0_31, %c0_32, %c8_33] : memref<1x8x128xbf16, #tpu.memory_space<vmem>>, vector<1x8x8xbf16>
    %42 = vector.shape_cast %41 : vector<1x8x8xbf16> to vector<8x8xbf16>
    %cst_34 = arith.constant dense<0.000000e+00> : vector<8x8xf32>
    %43 = tpu.matmul %38, %40, %cst_34 {dimension_numbers = #tpu.dot_dimension_numbers<[1], [1], [0], [0], [0, 0, 1, 0], [], []>} : vector<8x8xbf16>, vector<8x8xbf16>, vector<8x8xf32> -> vector<8x8xf32>
    %c0_35 = arith.constant 0 : index
    %c1 = arith.constant 1 : index
    %44 = vector.load %arg6[%c0_35, %c1] : memref<8x4xf32, #tpu.memory_space<vmem>>, vector<8x1xf32>
    %c0_36 = arith.constant 0 : index
    %c1_37 = arith.constant 1 : index
    %45 = vector.load %arg7[%c0_36, %c1_37] : memref<8x4xf32, #tpu.memory_space<vmem>>, vector<8x1xf32>
    %cst_38 = arith.constant dense<0xFF800000> : vector<8xf32>
    %46 = vector.multi_reduction <maximumf>, %43, %cst_38 [1] : vector<8x8xf32> to vector<8xf32>
    %47 = vector.shape_cast %46 : vector<8xf32> to vector<8x1xf32>
    %48 = arith.maximumf %44, %47 : vector<8x1xf32>
    %49 = arith.subf %44, %48 : vector<8x1xf32>
    %50 = math.exp %49 : vector<8x1xf32>
    %51 = vector.broadcast %48 : vector<8x1xf32> to vector<8x8xf32>
    %52 = arith.subf %43, %51 : vector<8x8xf32>
    %53 = math.exp %52 : vector<8x8xf32>
    %54 = arith.mulf %50, %45 : vector<8x1xf32>
    %cst_39 = arith.constant dense<0.000000e+00> : vector<8xf32>
    %55 = vector.multi_reduction <add>, %53, %cst_39 [1] : vector<8x8xf32> to vector<8xf32>
    %56 = vector.shape_cast %55 : vector<8xf32> to vector<8x1xf32>
    %57 = arith.addf %54, %56 : vector<8x1xf32>
    %c0_40 = arith.constant 0 : index
    %c1_41 = arith.constant 1 : index
    %58 = vector.load %arg7[%c0_40, %c1_41] : memref<8x4xf32, #tpu.memory_space<vmem>>, vector<8x1xf32>
    tpu.vector_store %arg7[%c0_40, %c1_41], %57 {strides = array<i32>} : memref<8x4xf32, #tpu.memory_space<vmem>>, vector<8x1xf32>,
    %59 = arith.truncf %53 : vector<8x8xf32> to vector<8x8xbf16>
    %cst_42 = arith.constant dense<0.000000e+00> : vector<8x8xf32>
    %60 = tpu.matmul %59, %42, %cst_42 {dimension_numbers = #tpu.dot_dimension_numbers<[1], [0], [0], [1], [0, 0, 1, 1], [], []>} : vector<8x8xbf16>, vector<8x8xbf16>, vector<8x8xf32> -> vector<8x8xf32>
    %c0_43 = arith.constant 0 : index
    %c8_44 = arith.constant 8 : index
    %61 = vector.load %arg8[%c0_43, %c8_44] : memref<8x128xf32, #tpu.memory_space<vmem>>, vector<8x8xf32>
    %62 = vector.broadcast %50 : vector<8x1xf32> to vector<8x8xf32>
    %63 = arith.mulf %62, %61 : vector<8x8xf32>
    %64 = arith.addf %63, %60 : vector<8x8xf32>
    %c0_45 = arith.constant 0 : index
    %c8_46 = arith.constant 8 : index
    %65 = vector.load %arg8[%c0_45, %c8_46] : memref<8x128xf32, #tpu.memory_space<vmem>>, vector<8x8xf32>
    tpu.vector_store %arg8[%c0_45, %c8_46], %64 {strides = array<i32>} : memref<8x128xf32, #tpu.memory_space<vmem>>, vector<8x8xf32>,
    %c0_47 = arith.constant 0 : index
    %c1_48 = arith.constant 1 : index
    %66 = vector.load %arg6[%c0_47, %c1_48] : memref<8x4xf32, #tpu.memory_space<vmem>>, vector<8x1xf32>
    tpu.vector_store %arg6[%c0_47, %c1_48], %48 {strides = array<i32>} : memref<8x4xf32, #tpu.memory_space<vmem>>, vector<8x1xf32>,
    %c0_49 = arith.constant 0 : index
    %c0_50 = arith.constant 0 : index
    %c16 = arith.constant 16 : index
    %67 = vector.load %arg2[%c0_49, %c0_50, %c16] : memref<1x8x128xbf16, #tpu.memory_space<vmem>>, vector<1x8x8xbf16>
    %68 = vector.shape_cast %67 : vector<1x8x8xbf16> to vector<8x8xbf16>
    %cst_51 = arith.constant 3.535160e-01 : bf16
    %69 = vector.broadcast %cst_51 : bf16 to vector<8x8xbf16>
    %70 = arith.mulf %68, %69 : vector<8x8xbf16>
    %c0_52 = arith.constant 0 : index
    %c0_53 = arith.constant 0 : index
    %c16_54 = arith.constant 16 : index
    %71 = vector.load %arg3[%c0_52, %c0_53, %c16_54] : memref<1x8x128xbf16, #tpu.memory_space<vmem>>, vector<1x8x8xbf16>
    %72 = vector.shape_cast %71 : vector<1x8x8xbf16> to vector<8x8xbf16>
    %c0_55 = arith.constant 0 : index
    %c0_56 = arith.constant 0 : index
    %c16_57 = arith.constant 16 : index
    %73 = vector.load %arg4[%c0_55, %c0_56, %c16_57] : memref<1x8x128xbf16, #tpu.memory_space<vmem>>, vector<1x8x8xbf16>
    %74 = vector.shape_cast %73 : vector<1x8x8xbf16> to vector<8x8xbf16>
    %cst_58 = arith.constant dense<0.000000e+00> : vector<8x8xf32>
    %75 = tpu.matmul %70, %72, %cst_58 {dimension_numbers = #tpu.dot_dimension_numbers<[1], [1], [0], [0], [0, 0, 1, 0], [], []>} : vector<8x8xbf16>, vector<8x8xbf16>, vector<8x8xf32> -> vector<8x8xf32>
    %c0_59 = arith.constant 0 : index
    %c2 = arith.constant 2 : index
    %76 = vector.load %arg6[%c0_59, %c2] : memref<8x4xf32, #tpu.memory_space<vmem>>, vector<8x1xf32>
    %c0_60 = arith.constant 0 : index
    %c2_61 = arith.constant 2 : index
    %77 = vector.load %arg7[%c0_60, %c2_61] : memref<8x4xf32, #tpu.memory_space<vmem>>, vector<8x1xf32>
    %cst_62 = arith.constant dense<0xFF800000> : vector<8xf32>
    %78 = vector.multi_reduction <maximumf>, %75, %cst_62 [1] : vector<8x8xf32> to vector<8xf32>
    %79 = vector.shape_cast %78 : vector<8xf32> to vector<8x1xf32>
    %80 = arith.maximumf %76, %79 : vector<8x1xf32>
    %81 = arith.subf %76, %80 : vector<8x1xf32>
    %82 = math.exp %81 : vector<8x1xf32>
    %83 = vector.broadcast %80 : vector<8x1xf32> to vector<8x8xf32>
    %84 = arith.subf %75, %83 : vector<8x8xf32>
    %85 = math.exp %84 : vector<8x8xf32>
    %86 = arith.mulf %82, %77 : vector<8x1xf32>
    %cst_63 = arith.constant dense<0.000000e+00> : vector<8xf32>
    %87 = vector.multi_reduction <add>, %85, %cst_63 [1] : vector<8x8xf32> to vector<8xf32>
    %88 = vector.shape_cast %87 : vector<8xf32> to vector<8x1xf32>
    %89 = arith.addf %86, %88 : vector<8x1xf32>
    %c0_64 = arith.constant 0 : index
    %c2_65 = arith.constant 2 : index
    %90 = vector.load %arg7[%c0_64, %c2_65] : memref<8x4xf32, #tpu.memory_space<vmem>>, vector<8x1xf32>
    tpu.vector_store %arg7[%c0_64, %c2_65], %89 {strides = array<i32>} : memref<8x4xf32, #tpu.memory_space<vmem>>, vector<8x1xf32>,
    %91 = arith.truncf %85 : vector<8x8xf32> to vector<8x8xbf16>
    %cst_66 = arith.constant dense<0.000000e+00> : vector<8x8xf32>
    %92 = tpu.matmul %91, %74, %cst_66 {dimension_numbers = #tpu.dot_dimension_numbers<[1], [0], [0], [1], [0, 0, 1, 1], [], []>} : vector<8x8xbf16>, vector<8x8xbf16>, vector<8x8xf32> -> vector<8x8xf32>
    %c0_67 = arith.constant 0 : index
    %c16_68 = arith.constant 16 : index
    %93 = vector.load %arg8[%c0_67, %c16_68] : memref<8x128xf32, #tpu.memory_space<vmem>>, vector<8x8xf32>
    %94 = vector.broadcast %82 : vector<8x1xf32> to vector<8x8xf32>
    %95 = arith.mulf %94, %93 : vector<8x8xf32>
    %96 = arith.addf %95, %92 : vector<8x8xf32>
    %c0_69 = arith.constant 0 : index
    %c16_70 = arith.constant 16 : index
    %97 = vector.load %arg8[%c0_69, %c16_70] : memref<8x128xf32, #tpu.memory_space<vmem>>, vector<8x8xf32>
    tpu.vector_store %arg8[%c0_69, %c16_70], %96 {strides = array<i32>} : memref<8x128xf32, #tpu.memory_space<vmem>>, vector<8x8xf32>,
    %c0_71 = arith.constant 0 : index
    %c2_72 = arith.constant 2 : index
    %98 = vector.load %arg6[%c0_71, %c2_72] : memref<8x4xf32, #tpu.memory_space<vmem>>, vector<8x1xf32>
    tpu.vector_store %arg6[%c0_71, %c2_72], %80 {strides = array<i32>} : memref<8x4xf32, #tpu.memory_space<vmem>>, vector<8x1xf32>,
    %c0_73 = arith.constant 0 : index
    %c0_74 = arith.constant 0 : index
    %c24 = arith.constant 24 : index
    %99 = vector.load %arg2[%c0_73, %c0_74, %c24] : memref<1x8x128xbf16, #tpu.memory_space<vmem>>, vector<1x8x8xbf16>
    %100 = vector.shape_cast %99 : vector<1x8x8xbf16> to vector<8x8xbf16>
    %cst_75 = arith.constant 3.535160e-01 : bf16
    %101 = vector.broadcast %cst_75 : bf16 to vector<8x8xbf16>
    %102 = arith.mulf %100, %101 : vector<8x8xbf16>
    %c0_76 = arith.constant 0 : index
    %c0_77 = arith.constant 0 : index
    %c24_78 = arith.constant 24 : index
    %103 = vector.load %arg3[%c0_76, %c0_77, %c24_78] : memref<1x8x128xbf16, #tpu.memory_space<vmem>>, vector<1x8x8xbf16>
    %104 = vector.shape_cast %103 : vector<1x8x8xbf16> to vector<8x8xbf16>
    %c0_79 = arith.constant 0 : index
    %c0_80 = arith.constant 0 : index
    %c24_81 = arith.constant 24 : index
    %105 = vector.load %arg4[%c0_79, %c0_80, %c24_81] : memref<1x8x128xbf16, #tpu.memory_space<vmem>>, vector<1x8x8xbf16>
    %106 = vector.shape_cast %105 : vector<1x8x8xbf16> to vector<8x8xbf16>
    %cst_82 = arith.constant dense<0.000000e+00> : vector<8x8xf32>
    %107 = tpu.matmul %102, %104, %cst_82 {dimension_numbers = #tpu.dot_dimension_numbers<[1], [1], [0], [0], [0, 0, 1, 0], [], []>} : vector<8x8xbf16>, vector<8x8xbf16>, vector<8x8xf32> -> vector<8x8xf32>
    %c0_83 = arith.constant 0 : index
    %c3 = arith.constant 3 : index
    %108 = vector.load %arg6[%c0_83, %c3] : memref<8x4xf32, #tpu.memory_space<vmem>>, vector<8x1xf32>
    %c0_84 = arith.constant 0 : index
    %c3_85 = arith.constant 3 : index
    %109 = vector.load %arg7[%c0_84, %c3_85] : memref<8x4xf32, #tpu.memory_space<vmem>>, vector<8x1xf32>
    %cst_86 = arith.constant dense<0xFF800000> : vector<8xf32>
    %110 = vector.multi_reduction <maximumf>, %107, %cst_86 [1] : vector<8x8xf32> to vector<8xf32>
    %111 = vector.shape_cast %110 : vector<8xf32> to vector<8x1xf32>
    %112 = arith.maximumf %108, %111 : vector<8x1xf32>
    %113 = arith.subf %108, %112 : vector<8x1xf32>
    %114 = math.exp %113 : vector<8x1xf32>
    %115 = vector.broadcast %112 : vector<8x1xf32> to vector<8x8xf32>
    %116 = arith.subf %107, %115 : vector<8x8xf32>
    %117 = math.exp %116 : vector<8x8xf32>
    %118 = arith.mulf %114, %109 : vector<8x1xf32>
    %cst_87 = arith.constant dense<0.000000e+00> : vector<8xf32>
    %119 = vector.multi_reduction <add>, %117, %cst_87 [1] : vector<8x8xf32> to vector<8xf32>
    %120 = vector.shape_cast %119 : vector<8xf32> to vector<8x1xf32>
    %121 = arith.addf %118, %120 : vector<8x1xf32>
    %c0_88 = arith.constant 0 : index
    %c3_89 = arith.constant 3 : index
    %122 = vector.load %arg7[%c0_88, %c3_89] : memref<8x4xf32, #tpu.memory_space<vmem>>, vector<8x1xf32>
    tpu.vector_store %arg7[%c0_88, %c3_89], %121 {strides = array<i32>} : memref<8x4xf32, #tpu.memory_space<vmem>>, vector<8x1xf32>,
    %123 = arith.truncf %117 : vector<8x8xf32> to vector<8x8xbf16>
    %cst_90 = arith.constant dense<0.000000e+00> : vector<8x8xf32>
    %124 = tpu.matmul %123, %106, %cst_90 {dimension_numbers = #tpu.dot_dimension_numbers<[1], [0], [0], [1], [0, 0, 1, 1], [], []>} : vector<8x8xbf16>, vector<8x8xbf16>, vector<8x8xf32> -> vector<8x8xf32>
    %c0_91 = arith.constant 0 : index
    %c24_92 = arith.constant 24 : index
    %125 = vector.load %arg8[%c0_91, %c24_92] : memref<8x128xf32, #tpu.memory_space<vmem>>, vector<8x8xf32>
    %126 = vector.broadcast %114 : vector<8x1xf32> to vector<8x8xf32>
    %127 = arith.mulf %126, %125 : vector<8x8xf32>
    %128 = arith.addf %127, %124 : vector<8x8xf32>
    %c0_93 = arith.constant 0 : index
    %c24_94 = arith.constant 24 : index
    %129 = vector.load %arg8[%c0_93, %c24_94] : memref<8x128xf32, #tpu.memory_space<vmem>>, vector<8x8xf32>
    tpu.vector_store %arg8[%c0_93, %c24_94], %128 {strides = array<i32>} : memref<8x128xf32, #tpu.memory_space<vmem>>, vector<8x8xf32>,
    %c0_95 = arith.constant 0 : index
    %c3_96 = arith.constant 3 : index
    %130 = vector.load %arg6[%c0_95, %c3_96] : memref<8x4xf32, #tpu.memory_space<vmem>>, vector<8x1xf32>
    tpu.vector_store %arg6[%c0_95, %c3_96], %112 {strides = array<i32>} : memref<8x4xf32, #tpu.memory_space<vmem>>, vector<8x1xf32>,
    %c0_i32_97 = arith.constant 0 : i32
    %131 = arith.cmpi eq, %arg1, %c0_i32_97 : i32
    %132 = arith.extui %131 : i1 to i32
    %c0_i32_98 = arith.constant 0 : i32
    %133 = arith.cmpi ne, %132, %c0_i32_98 : i32
    scf.if %133 {
      %c0_99 = arith.constant 0 : index
      %c0_100 = arith.constant 0 : index
      %134 = vector.load %arg7[%c0_99, %c0_100] : memref<8x4xf32, #tpu.memory_space<vmem>>, vector<8x1xf32>
      %135 = tpu.reciprocal %134 {approx = true} : vector<8x1xf32> -> vector<8x1xf32>
      %c0_101 = arith.constant 0 : index
      %c0_102 = arith.constant 0 : index
      %136 = vector.load %arg8[%c0_101, %c0_102] : memref<8x128xf32, #tpu.memory_space<vmem>>, vector<8x8xf32>
      %137 = vector.broadcast %135 : vector<8x1xf32> to vector<8x8xf32>
      %138 = arith.mulf %136, %137 : vector<8x8xf32>
      %139 = arith.truncf %138 : vector<8x8xf32> to vector<8x8xbf16>
      %c0_103 = arith.constant 0 : index
      %c1_104 = arith.constant 1 : index
      %140 = vector.load %arg7[%c0_103, %c1_104] : memref<8x4xf32, #tpu.memory_space<vmem>>, vector<8x1xf32>
      %141 = tpu.reciprocal %140 {approx = true} : vector<8x1xf32> -> vector<8x1xf32>
      %c0_105 = arith.constant 0 : index
      %c8_106 = arith.constant 8 : index
      %142 = vector.load %arg8[%c0_105, %c8_106] : memref<8x128xf32, #tpu.memory_space<vmem>>, vector<8x8xf32>
      %143 = vector.broadcast %141 : vector<8x1xf32> to vector<8x8xf32>
      %144 = arith.mulf %142, %143 : vector<8x8xf32>
      %145 = arith.truncf %144 : vector<8x8xf32> to vector<8x8xbf16>
      %c0_107 = arith.constant 0 : index
      %c2_108 = arith.constant 2 : index
      %146 = vector.load %arg7[%c0_107, %c2_108] : memref<8x4xf32, #tpu.memory_space<vmem>>, vector<8x1xf32>
      %147 = tpu.reciprocal %146 {approx = true} : vector<8x1xf32> -> vector<8x1xf32>
      %c0_109 = arith.constant 0 : index
      %c16_110 = arith.constant 16 : index
      %148 = vector.load %arg8[%c0_109, %c16_110] : memref<8x128xf32, #tpu.memory_space<vmem>>, vector<8x8xf32>
      %149 = vector.broadcast %147 : vector<8x1xf32> to vector<8x8xf32>
      %150 = arith.mulf %148, %149 : vector<8x8xf32>
      %151 = arith.truncf %150 : vector<8x8xf32> to vector<8x8xbf16>
      %c0_111 = arith.constant 0 : index
      %c3_112 = arith.constant 3 : index
      %152 = vector.load %arg7[%c0_111, %c3_112] : memref<8x4xf32, #tpu.memory_space<vmem>>, vector<8x1xf32>
      %153 = tpu.reciprocal %152 {approx = true} : vector<8x1xf32> -> vector<8x1xf32>
      %c0_113 = arith.constant 0 : index
      %c24_114 = arith.constant 24 : index
      %154 = vector.load %arg8[%c0_113, %c24_114] : memref<8x128xf32, #tpu.memory_space<vmem>>, vector<8x8xf32>
      %155 = vector.broadcast %153 : vector<8x1xf32> to vector<8x8xf32>
      %156 = arith.mulf %154, %155 : vector<8x8xf32>
      %157 = arith.truncf %156 : vector<8x8xf32> to vector<8x8xbf16>
      %cst_115 = arith.constant 0.000000e+00 : bf16
      %158 = vector.broadcast %cst_115 : bf16 to vector<8x96xbf16>
      %159 = tpu.concatenate %139, %145, %151, %157, %158 in 1 : vector<8x8xbf16>, vector<8x8xbf16>, vector<8x8xbf16>, vector<8x8xbf16>, vector<8x96xbf16> -> vector<8x128xbf16>
      %c0_116 = arith.constant 0 : index
      %c0_117 = arith.constant 0 : index
      %c0_118 = arith.constant 0 : index
      %160 = vector.load %arg5[%c0_116, %c0_117, %c0_118] : memref<1x8x128xbf16, #tpu.memory_space<vmem>>, vector<1x8x128xbf16>
      %161 = vector.shape_cast %160 : vector<1x8x128xbf16> to vector<8x128xbf16>
      %162 = vector.shape_cast %159 : vector<8x128xbf16> to vector<1x8x128xbf16>
      tpu.vector_store %arg5[%c0_116, %c0_117, %c0_118], %162 {strides = array<i32>} : memref<1x8x128xbf16, #tpu.memory_space<vmem>>, vector<1x8x128xbf16>,
    } else {
    }
    return
  }
  func.func @transform_0(%arg0: i32, %arg1: i32) -> (i32, i32, i32) {
    %c0_i32 = arith.constant 0 : i32
    %c0_i32_0 = arith.constant 0 : i32
    %c0_i32_1 = arith.constant 0 : i32
    return %arg0, %c0_i32, %c0_i32_0 : i32, i32, i32
  }
  func.func @transform_1(%arg0: i32, %arg1: i32) -> (i32, i32, i32) {
    %c1_i32 = arith.constant 1 : i32
    %c0_i32 = arith.constant 0 : i32
    return %arg0, %arg1, %c1_i32 : i32, i32, i32
  }
  func.func @transform_2(%arg0: i32, %arg1: i32) -> (i32, i32, i32) {
    %c2_i32 = arith.constant 2 : i32
    %c0_i32 = arith.constant 0 : i32
    return %arg0, %arg1, %c2_i32 : i32, i32, i32
  }
  func.func @transform_3(%arg0: i32, %arg1: i32) -> (i32, i32, i32) {
    %c0_i32 = arith.constant 0 : i32
    %c0_i32_0 = arith.constant 0 : i32
    %c0_i32_1 = arith.constant 0 : i32
    return %arg0, %c0_i32, %c0_i32_0 : i32, i32, i32
  }
}

module attributes {stable_mosaic.version = 11 : i64} {
  func.func @_linear_kernel(%arg0: i32, %arg1: i32, %arg2: memref<8x128xbf16, #tpu.memory_space<vmem>>, %arg3: memref<128x128xbf16, #tpu.memory_space<vmem>>, %arg4: memref<1x128xf32, #tpu.memory_space<vmem>>, %arg5: memref<8x128xf32, #tpu.memory_space<vmem>>) attributes {dimension_semantics = [#tpu.dimension_semantics<parallel>, #tpu.dimension_semantics<parallel>], iteration_bounds = array<i64: 1, 2>, scalar_prefetch = 0 : i64, scratch_operands = 0 : i64, tpu.core_type = #tpu.core_type<tc>, window_params = [{transform_indices = @transform_0, window_bounds = array<i64: 8, 128>}, {transform_indices = @transform_1, window_bounds = array<i64: 128, 128>}, {transform_indices = @transform_2, window_bounds = array<i64: 1, 128>}, {transform_indices = @transform_3, window_bounds = array<i64: 8, 128>}]} {
    %c0 = arith.constant 0 : index
    %c0_0 = arith.constant 0 : index
    %0 = vector.load %arg2[%c0, %c0_0] : memref<8x128xbf16, #tpu.memory_space<vmem>>, vector<8x128xbf16>
    %c0_1 = arith.constant 0 : index
    %c0_2 = arith.constant 0 : index
    %1 = vector.load %arg3[%c0_1, %c0_2] : memref<128x128xbf16, #tpu.memory_space<vmem>>, vector<128x128xbf16>
    %cst = arith.constant dense<0.000000e+00> : vector<8x128xf32>
    %2 = tpu.matmul %0, %1, %cst {dimension_numbers = #tpu.dot_dimension_numbers<[1], [0], [0], [1], [0, 0, 1, 1], [], []>} : vector<8x128xbf16>, vector<128x128xbf16>, vector<8x128xf32> -> vector<8x128xf32>
    %c0_3 = arith.constant 0 : index
    %c0_4 = arith.constant 0 : index
    %3 = vector.load %arg4[%c0_3, %c0_4] : memref<1x128xf32, #tpu.memory_space<vmem>>, vector<1x128xf32>
    %4 = vector.broadcast %3 : vector<1x128xf32> to vector<8x128xf32>
    %5 = arith.addf %2, %4 : vector<8x128xf32>
    %c0_5 = arith.constant 0 : index
    %c0_6 = arith.constant 0 : index
    %6 = vector.load %arg5[%c0_5, %c0_6] : memref<8x128xf32, #tpu.memory_space<vmem>>, vector<8x128xf32>
    tpu.vector_store %arg5[%c0_5, %c0_6], %5 {strides = array<i32>} : memref<8x128xf32, #tpu.memory_space<vmem>>, vector<8x128xf32>,
    return
  }
  func.func @transform_0(%arg0: i32, %arg1: i32) -> (i32, i32) {
    %c0_i32 = arith.constant 0 : i32
    %c0_i32_0 = arith.constant 0 : i32
    return %arg1, %c0_i32 : i32, i32
  }
  func.func @transform_1(%arg0: i32, %arg1: i32) -> (i32, i32) {
    %c0_i32 = arith.constant 0 : i32
    %c0_i32_0 = arith.constant 0 : i32
    return %c0_i32, %arg0 : i32, i32
  }
  func.func @transform_2(%arg0: i32, %arg1: i32) -> (i32, i32) {
    %c0_i32 = arith.constant 0 : i32
    %c0_i32_0 = arith.constant 0 : i32
    return %c0_i32, %arg0 : i32, i32
  }
  func.func @transform_3(%arg0: i32, %arg1: i32) -> (i32, i32) {
    %c0_i32 = arith.constant 0 : i32
    return %arg1, %arg0 : i32, i32
  }
}

</mosaic_0001>

<llo_original>
// kernel: multi_head_self_attention.3
$region0: #{multi_head_self_attention.3}
  #allocation0 [shape = 'u32[]', space=smem, size = 0x4, offset = 0x4, fixed_abs, tag = 'smem constant byte address 0x4 - core index']
  #allocation1 [shape = 'u32[72,128]{1,0:T(1,128)}', space=vmem, size = 0x9000, scoped, tag = 'internal scratch']
  %s0 = inlined_call_operand.vmem [shape: bf16[16,32], index: 0, kind: input, shape index: {}]
  %s1 = inlined_call_operand.hbm [shape: bf16[32,384], index: 1, kind: input, shape index: {}]
  %s2 = inlined_call_operand.vmem [shape: f32[1,384], index: 2, kind: input, shape index: {}]
  %s3 = inlined_call_operand.vmem [shape: bf16[16,384], index: 3, kind: output, shape index: {}]
  %s4 = sld [smem:[#allocation0]]
  $region49: #{multi_head_self_attention.3} parent=0
    _
  %s6 = ssub.s32 1, %s4
  %s7 = scalar_select 0, %s6, %s4
  $region1: #{multi_head_self_attention.3} parent=0
    #allocation2 [shape = 'u8[24576]{0}', space=vmem, size = 0x6000, scoped, tag = 'input window, operand 1, single buffered']
    #allocation3 [shape = 's32[2]{0}', space=sflag, size = 0x8, scoped, tag = 'scoped memory for multi_head_self_attention.3']
    %8 = vsyncpa [#allocation3], 0
    loop: start=0, step=1, limit=4
    $region2: #{multi_head_self_attention.3} parent=1 // loop_pre_header
      _
    $region3: #{multi_head_self_attention.3} parent=1 // loop_header
      %s10 = sphi 0, %s14
      %p11 = scmp.ge.s32.totalorder %s10, 4
      %s17 = sphi 0, %s29
      %s18 = sphi 0, %s25
      %s19 = sphi 0, %s17
      %s20 = sphi 0, %s18
      %s21 = sphi 0, %s19
      %s22 = sphi 0, %s20
      %s32 = sphi 0, %s34
      %s35 = sphi 0, %s32
      %s36 = sphi 0, %s35
      %s52 = sphi 0, %s36
      %s58 = sphi 0, %s60
      %s61 = sphi 0, %s58
      %s62 = sphi 0, %s61
      %s78 = sphi 0, %s62
      %s84 = sphi 0, %s86
      %s87 = sphi 0, %s84
      %s88 = sphi 0, %s87
      %s104 = sphi 0, %s88
      %s112 = sphi 0, %s114
      %s115 = sphi 0, %s112
      %s116 = sphi 0, %s115
      %s132 = sphi 0, %s116
    $region4: #{multi_head_self_attention.3} parent=1 // loop_header_branch
      %13 = sbr.rel (%p11) target = $region8
    $region5: #{multi_head_self_attention.3} parent=1 // loop_body
      %s15 = ssub.s32 %s10, 1
      %s16 = ssub.s32 %s10, 2
      %s23 = sadd.s32 1, %s18
      %p24 = scmp.ge.s32.totalorder %s23, 2
      %s25 = scalar_select %p24, 0, %s23
      %s26 = sadd.s32 1, %s17
      %s27 = scalar_select %p24, %s26, %s17
      %p28 = scmp.ge.s32.totalorder %s27, 1
      %s29 = scalar_select %p28, 0, %s27
      %s30 = ssub.s32 %s18, %s25
      %p31 = scmp.eq.s32.totalorder %s30, 0
      %s33 = sadd.s32 %s32, 1
      %s34 = scalar_select %p31, %s32, %s33
      %p37 = pneg %p31
      %p38 = scmp.eq.s32.totalorder %s10, 1
      %p39 = por %p37, %p38
      %p40 = scmp.ne.s32.totalorder %s32, %s35
      %p41 = scmp.eq.s32.totalorder %s10, 0
      %p42 = por %p40, %p41
      %p43 = scmp.ne.s32.totalorder %s32, %s35
      %p44 = scmp.eq.s32.totalorder %s15, 1
      %p45 = por %p43, %p44
      %p46 = scmp.ne.s32.totalorder %s35, %s36
      %p47 = scmp.eq.s32.totalorder %s15, 0
      %p48 = por %p46, %p47
      %p49 = scmp.ne.s32.totalorder %s35, %s36
      %p50 = scmp.eq.s32.totalorder %s16, 1
      %p51 = por %p49, %p50
      %p53 = scmp.ne.s32.totalorder %s36, %s52
      %p54 = scmp.eq.s32.totalorder %s16, 0
      %p55 = por %p53, %p54
      %s56 = ssub.s32 %s17, %s29
      %p57 = scmp.eq.s32.totalorder %s56, 0
      %s59 = sadd.s32 %s58, 1
      %s60 = scalar_select %p57, %s58, %s59
      %p63 = pneg %p57
      %p64 = scmp.eq.s32.totalorder %s10, 1
      %p65 = por %p63, %p64
      %p66 = scmp.ne.s32.totalorder %s58, %s61
      %p67 = scmp.eq.s32.totalorder %s10, 0
      %p68 = por %p66, %p67
      %p69 = scmp.ne.s32.totalorder %s58, %s61
      %p70 = scmp.eq.s32.totalorder %s15, 1
      %p71 = por %p69, %p70
      %p72 = scmp.ne.s32.totalorder %s61, %s62
      %p73 = scmp.eq.s32.totalorder %s15, 0
      %p74 = por %p72, %p73
      %p75 = scmp.ne.s32.totalorder %s61, %s62
      %p76 = scmp.eq.s32.totalorder %s16, 1
      %p77 = por %p75, %p76
      %p79 = scmp.ne.s32.totalorder %s62, %s78
      %p80 = scmp.eq.s32.totalorder %s16, 0
      %p81 = por %p79, %p80
      %s82 = ssub.s32 %s17, %s29
      %p83 = scmp.eq.s32.totalorder %s82, 0
      %s85 = sadd.s32 %s84, 1
      %s86 = scalar_select %p83, %s84, %s85
      %p89 = pneg %p83
      %p90 = scmp.eq.s32.totalorder %s10, 1
      %p91 = por %p89, %p90
      %p92 = scmp.ne.s32.totalorder %s84, %s87
      %p93 = scmp.eq.s32.totalorder %s10, 0
      %p94 = por %p92, %p93
      %p95 = scmp.ne.s32.totalorder %s84, %s87
      %p96 = scmp.eq.s32.totalorder %s15, 1
      %p97 = por %p95, %p96
      %p98 = scmp.ne.s32.totalorder %s87, %s88
      %p99 = scmp.eq.s32.totalorder %s15, 0
      %p100 = por %p98, %p99
      %p101 = scmp.ne.s32.totalorder %s87, %s88
      %p102 = scmp.eq.s32.totalorder %s16, 1
      %p103 = por %p101, %p102
      %p105 = scmp.ne.s32.totalorder %s88, %s104
      %p106 = scmp.eq.s32.totalorder %s16, 0
      %p107 = por %p105, %p106
      %s108 = ssub.s32 %s18, %s25
      %s109 = ssub.s32 %s17, %s29
      %s110 = sor.u32 %s108, %s109
      %p111 = scmp.eq.s32.totalorder %s110, 0
      %s113 = sadd.s32 %s112, 1
      %s114 = scalar_select %p111, %s112, %s113
      %p117 = pneg %p111
      %p118 = scmp.eq.s32.totalorder %s10, 1
      %p119 = por %p117, %p118
      %p120 = scmp.ne.s32.totalorder %s112, %s115
      %p121 = scmp.eq.s32.totalorder %s10, 0
      %p122 = por %p120, %p121
      %p123 = scmp.ne.s32.totalorder %s112, %s115
      %p124 = scmp.eq.s32.totalorder %s15, 1
      %p125 = por %p123, %p124
      %p126 = scmp.ne.s32.totalorder %s115, %s116
      %p127 = scmp.eq.s32.totalorder %s15, 0
      %p128 = por %p126, %p127
      %p129 = scmp.ne.s32.totalorder %s115, %s116
      %p130 = scmp.eq.s32.totalorder %s16, 1
      %p131 = por %p129, %p130
      %p133 = scmp.ne.s32.totalorder %s116, %s132
      %p134 = scmp.eq.s32.totalorder %s16, 0
      %p135 = por %p133, %p134
      %p136 = scmp.le.s32.totalorder 1, %s10
      %p137 = scmp.lt.s32.totalorder %s10, 3
      %p138 = pnand %p136, %p137
      %p139 = pneg %p138
      // Predicated region
      $region9: #{multi_head_self_attention.3} parent=5 // pred_check
        _
      $region10: #{multi_head_self_attention.3} parent=5 // pred_check_branch
        %141 = sbr.rel (%p138) target = $region12
      $region11: #{multi_head_self_attention.3} parent=5 // pred_region
        %s142 = ssub.s32 %s10, 1
        // Predicated region
        $region13: #{multi_head_self_attention.3} parent=11 // pred_check
          %p143 = pneg %p74
        $region14: #{multi_head_self_attention.3} parent=11 // pred_check_branch
          %145 = sbr.rel (%p143) target = $region16
        $region15: #{multi_head_self_attention.3} parent=11 // pred_region
          %s146 = smul.u32 3, %s19
          %148 = vsyncadd [#allocation3], 0
          %s149 = smul.addr %s146, 4
          %s150 = scalar_lea.hbm %s1, %s149
          %s151 = sshll.u32 %s150, 4
          %s152 = int_to_ptr.hbm [resolvable:$true] %s151
          %s153 = sshll.u32 [#allocation2], 4
          %s154 = int_to_ptr.vmem [resolvable:$true] %s153
          %159 = dma.hbm_to_vmem [thread:$0]  %s152, 768, %s154, [#allocation3], 192, 192, 12
        $region16: #{multi_head_self_attention.3} parent=11 // pred_fallthru
          _
        // Predicated region
        $region17: #{multi_head_self_attention.3} parent=11 // pred_check
          %p160 = pneg %p100
        $region18: #{multi_head_self_attention.3} parent=11 // pred_check_branch
          %162 = sbr.rel (%p160) target = $region20
        $region19: #{multi_head_self_attention.3} parent=11 // pred_region
          %s163 = smul.u32 3, %s19
          %p164 = scmp.lt.s32.totalorder %s163, 2
          %s165 = scalar_select %p164, %s163, 2
          %s166 = scalar_lea.vmem %s2, %s165
          %s167 = smul.u32 3, %s19
        $region20: #{multi_head_self_attention.3} parent=11 // pred_fallthru
          _
      $region12: #{multi_head_self_attention.3} parent=5 // pred_fallthru
        _
      %p168 = scmp.lt.s32.totalorder %s10, 2
      // Predicated region
      $region21: #{multi_head_self_attention.3} parent=5 // pred_check
        %p169 = pneg %p168
      $region22: #{multi_head_self_attention.3} parent=5 // pred_check_branch
        %171 = sbr.rel (%p169) target = $region24
      $region23: #{multi_head_self_attention.3} parent=5 // pred_region
        // Predicated region
        $region25: #{multi_head_self_attention.3} parent=23 // pred_check
          %p172 = pneg %p42
        $region26: #{multi_head_self_attention.3} parent=23 // pred_check_branch
          %174 = sbr.rel (%p172) target = $region28
        $region27: #{multi_head_self_attention.3} parent=23 // pred_region
          %p175 = scmp.lt.s32.totalorder %s18, 1
          %s176 = scalar_select %p175, %s18, 1
          %s177 = smul.addr %s176, 4
          %s178 = scalar_lea.vmem %s0, %s177
        $region28: #{multi_head_self_attention.3} parent=23 // pred_fallthru
          _
      $region24: #{multi_head_self_attention.3} parent=5 // pred_fallthru
        _
      %p179 = scmp.le.s32.totalorder 1, %s10
      %p180 = scmp.lt.s32.totalorder %s10, 3
      %p181 = pnand %p179, %p180
      %p182 = pneg %p181
      // Predicated region
      $region29: #{multi_head_self_attention.3} parent=5 // pred_check
        _
      $region30: #{multi_head_self_attention.3} parent=5 // pred_check_branch
        %184 = sbr.rel (%p181) target = $region32
      $region31: #{multi_head_self_attention.3} parent=5 // pred_region
        %s185 = ssub.s32 %s10, 1
        // Predicated region
        $region33: #{multi_head_self_attention.3} parent=31 // pred_check
          %p186 = pneg %p74
        $region34: #{multi_head_self_attention.3} parent=31 // pred_check_branch
          %188 = sbr.rel (%p186) target = $region36
        $region35: #{multi_head_self_attention.3} parent=31 // pred_region
          %190 = dma.done [#allocation3], 768
        $region36: #{multi_head_self_attention.3} parent=31 // pred_fallthru
          _
        %p191 = scmp.lt.s32.totalorder %s20, 1
        %s192 = scalar_select %p191, %s20, 1
        %s193 = smul.addr %s192, 4
        %s194 = scalar_lea.vmem %s0, %s193
        %p195 = pneg %p48
        %p196 = pneg %p45
        %p197 = pneg %p74
        %p198 = pneg %p71
        %s199 = smul.u32 3, %s19
        %p200 = scmp.lt.s32.totalorder %s199, 2
        %s201 = scalar_select %p200, %s199, 2
        %s202 = scalar_lea.vmem %s2, %s201
        %p203 = pneg %p100
        %p204 = pneg %p97
        %p205 = pneg %p128
        %p206 = pneg %p125
        %s207 = smul.u32 3, %s19
        %p208 = scmp.lt.s32.totalorder %s20, 1
        %s209 = scalar_select %p208, %s20, 1
        %p210 = scmp.lt.s32.totalorder %s207, 2
        %s211 = scalar_select %p210, %s207, 2
        %s212 = smul.addr %s209, 3
        %s213 = sadd.s32 %s211, %s212
        %s214 = smul.addr %s213, 4
        %s215 = scalar_lea.vmem %s3, %s214
        %p216 = scmp.lt.s32.totalorder %s20, 1
        %s217 = scalar_select %p216, %s20, 1
        %s218 = smul.addr %s217, 4
        %s219 = scalar_lea.vmem %s0, %s218
        %s220 = smul.u32 3, %s19
        %s221 = smul.u32 3, %s19
        %p222 = scmp.lt.s32.totalorder %s221, 2
        %s223 = scalar_select %p222, %s221, 2
        %s224 = scalar_lea.vmem %s2, %s223
        %s225 = smul.u32 3, %s19
        %s226 = smul.u32 3, %s19
        %p227 = scmp.lt.s32.totalorder %s20, 1
        %s228 = scalar_select %p227, %s20, 1
        %p229 = scmp.lt.s32.totalorder %s226, 2
        %s230 = scalar_select %p229, %s226, 2
        %s231 = smul.addr %s228, 3
        %s232 = sadd.s32 %s230, %s231
        %s233 = smul.addr %s232, 4
        %s234 = scalar_lea.vmem %s3, %s233
        %s235 = smul.u32 3, %s19
        %v237 = vld [vmem:[%s219] sm:$0xf]
        %v238 = vld [vmem:[#allocation2] sm:$0xff]
        %v239 = vld [vmem:[#allocation2 + $0x8] sm:$0xf]
        %v240 = vld [vmem:[#allocation2 + $0xc] sm:$0xff]
        %v241 = vld [vmem:[#allocation2 + $0x14] sm:$0xf]
        %v242 = vld [vmem:[#allocation2 + $0x18] sm:$0xff]
        %v243 = vld [vmem:[#allocation2 + $0x20] sm:$0xf]
        %v244 = vld [vmem:[#allocation2 + $0x24] sm:$0xff]
        %v245 = vld [vmem:[#allocation2 + $0x2c] sm:$0xf]
        %v246 = vld [vmem:[%s224] sm:$0x7]
        %v248 = vperm.slane %v246, 0
        %v249 = vperm.slane %v246, 1
        %v250 = vperm.slane %v246, 2
        %v262 = vunpack.c.l.b16 %v238
        %v263 = vunpack.c.h.b16 %v238
        %v264 = vunpack.c.l.b16 %v239
        %v265 = vunpack.c.l.b16 %v240
        %v266 = vunpack.c.h.b16 %v240
        %v267 = vunpack.c.l.b16 %v241
        %v268 = vunpack.c.l.b16 %v242
        %v269 = vunpack.c.h.b16 %v242
        %v270 = vunpack.c.l.b16 %v243
        %v271 = vunpack.c.l.b16 %v244
        %v272 = vunpack.c.h.b16 %v244
        %v273 = vunpack.c.l.b16 %v245
        %v274 = vpack.c.b16 %v265, %v262
        %v275 = vpack.c.b16 %v266, %v263
        %v276 = vpack.c.b16 %v267, %v264
        %v277 = vpack.c.b16 %v271, %v268
        %v278 = vpack.c.b16 %v272, %v269
        %v279 = vpack.c.b16 %v273, %v270
        %vm286 = vcmask 261120
        %v288 = vsel %vm286, %v237, 0
        %290 = vmatpush.bf16.msra.mxu0 0
        %291 = vmatpush.bf16.msra.mxu0 0
        %292 = vmatpush.bf16.msra.mxu0 0
        %293 = vmatpush.bf16.msra.mxu0 0
        %294 = vmatpush.bf16.msra.mxu0 0
        %295 = vmatpush.bf16.msra.mxu0 0
        %296 = vmatpush.bf16.msra.mxu0 %v277
        %297 = vmatpush.bf16.msra.mxu0 %v274
        %298 = vmatmul.bf16.gmra.mxu0 %v288
        %v299 = vpop.f32.mrf.mxu0
        %v300 = vadd.f32 %v248, %v299
        %v301 = vpop.f32.mrf.mxu0
        %302 = vdwg.mxu0
        %303 = vmatpush.bf16.msra.mxu0 0
        %304 = vmatpush.bf16.msra.mxu0 0
        %305 = vmatpush.bf16.msra.mxu0 0
        %306 = vmatpush.bf16.msra.mxu0 0
        %307 = vmatpush.bf16.msra.mxu0 0
        %308 = vmatpush.bf16.msra.mxu0 0
        %309 = vmatpush.bf16.msra.mxu0 %v278
        %310 = vmatpush.bf16.msra.mxu0 %v275
        %311 = vmatmul.bf16.gmra.mxu0 %v288
        %v312 = vpop.f32.mrf.mxu0
        %v313 = vadd.f32 %v249, %v312
        %v314 = vpop.f32.mrf.mxu0
        %315 = vdwg.mxu0
        %316 = vmatpush.bf16.msra.mxu0 0
        %317 = vmatpush.bf16.msra.mxu0 0
        %318 = vmatpush.bf16.msra.mxu0 0
        %319 = vmatpush.bf16.msra.mxu0 0
        %320 = vmatpush.bf16.msra.mxu0 0
        %321 = vmatpush.bf16.msra.mxu0 0
        %322 = vmatpush.bf16.msra.mxu0 %v279
        %323 = vmatpush.bf16.msra.mxu0 %v276
        %324 = vmatmul.bf16.gmra.mxu0 %v288
        %v325 = vpop.f32.mrf.mxu0
        %v326 = vadd.f32 %v250, %v325
        %v327 = vpop.f32.mrf.mxu0
        %328 = vdwg.mxu0
        %v329 = vpack.c.bf16 %v313, %v300
        %v330 = vpack.c.bf16 %v326, %v326
        %331 = vst [vmem:[%s234] sm:$0xff] %v329
        %332 = vst [vmem:[%s234 + $0x8] sm:$0xf] %v330
        %s333 = smul.u32 3, %s19
        %p334 = scmp.lt.s32.totalorder %s20, 1
        %s335 = scalar_select %p334, %s20, 1
        %p336 = scmp.lt.s32.totalorder %s333, 2
        %s337 = scalar_select %p336, %s333, 2
        %s338 = smul.addr %s335, 3
        %s339 = sadd.s32 %s337, %s338
        %s340 = smul.addr %s339, 4
        %s341 = scalar_lea.vmem %s3, %s340
        // Predicated region
        $region37: #{multi_head_self_attention.3} parent=31 // pred_check
          %p342 = pneg %p125
        $region38: #{multi_head_self_attention.3} parent=31 // pred_check_branch
          %344 = sbr.rel (%p342) target = $region40
        $region39: #{multi_head_self_attention.3} parent=31 // pred_region
          %s345 = smul.u32 3, %s19
        $region40: #{multi_head_self_attention.3} parent=31 // pred_fallthru
          _
      $region32: #{multi_head_self_attention.3} parent=5 // pred_fallthru
        _
      %p346 = scmp.le.s32.totalorder 2, %s10
      // Predicated region
      $region41: #{multi_head_self_attention.3} parent=5 // pred_check
        %p347 = pneg %p346
      $region42: #{multi_head_self_attention.3} parent=5 // pred_check_branch
        %349 = sbr.rel (%p347) target = $region44
      $region43: #{multi_head_self_attention.3} parent=5 // pred_region
        %s350 = ssub.s32 %s10, 2
        // Predicated region
        $region45: #{multi_head_self_attention.3} parent=43 // pred_check
          %p351 = pneg %p131
        $region46: #{multi_head_self_attention.3} parent=43 // pred_check_branch
          %353 = sbr.rel (%p351) target = $region48
        $region47: #{multi_head_self_attention.3} parent=43 // pred_region
          %s354 = smul.u32 3, %s21
          %p355 = scmp.lt.s32.totalorder %s22, 1
          %s356 = scalar_select %p355, %s22, 1
          %p357 = scmp.lt.s32.totalorder %s354, 2
          %s358 = scalar_select %p357, %s354, 2
          %s359 = smul.addr %s356, 3
          %s360 = sadd.s32 %s358, %s359
          %s361 = smul.addr %s360, 4
          %s362 = scalar_lea.vmem %s3, %s361
        $region48: #{multi_head_self_attention.3} parent=43 // pred_fallthru
          _
      $region44: #{multi_head_self_attention.3} parent=5 // pred_fallthru
        _
    $region6: #{multi_head_self_attention.3} parent=1 // loop_footer
      %s14 = sadd.s32 1, %s10
    $region7: #{multi_head_self_attention.3} parent=1 // loop_footer_branch
      %9 = sbr.rel target = $region3
    $region8: #{multi_head_self_attention.3} parent=1 // loop_exit
      _
    %363 = vsyncpa [#allocation3], 1
    %s364 = scalar_lea.sflag [#allocation3], 1
    %365 = vsyncpa %s364, 1

// kernel: multi_head_self_attention.4
$region0: #{multi_head_self_attention.4}
  #allocation0 [shape = 'u32[]', space=smem, size = 0x4, offset = 0x4, fixed_abs, tag = 'smem constant byte address 0x4 - core index']
  #allocation1 [shape = 'u32[72,128]{1,0:T(1,128)}', space=vmem, size = 0x9000, scoped, tag = 'internal scratch']
  #allocation2 [shape = 'f32[8,4]{1,0:T(8,128)}', space=vmem, size = 0x1000, scoped, tag = 'scratch operand']
  #allocation3 [shape = 'f32[8,4]{1,0:T(8,128)}', space=vmem, size = 0x1000, scoped, tag = 'scratch operand']
  #allocation4 [shape = 'f32[8,128]{1,0:T(8,128)}', space=vmem, size = 0x1000, scoped, tag = 'scratch operand']
  %s0 = inlined_call_operand.vmem [shape: bf16[2,8,384], index: 0, kind: input, shape index: {}, may-alias: {0,1,2}]
  %s1 = inlined_call_operand.vmem [shape: bf16[2,8,384], index: 1, kind: input, shape index: {}, may-alias: {0,1,2}]
  %s2 = inlined_call_operand.vmem [shape: bf16[2,8,384], index: 2, kind: input, shape index: {}, may-alias: {0,1,2}]
  %s3 = inlined_call_operand.vmem [shape: bf16[2,8,128], index: 3, kind: output, shape index: {}]
  %s4 = sld [smem:[#allocation0]]
  $region53: #{multi_head_self_attention.4} parent=0
    _
  %s6 = ssub.s32 1, %s4
  %s7 = scalar_select 0, %s6, %s4
  loop: start=0, step=1, limit=4
  $region2: #{multi_head_self_attention.4} parent=0 // loop_pre_header
    _
  $region3: #{multi_head_self_attention.4} parent=0 // loop_header
    %s9 = sphi 0, %s13
    %p10 = scmp.ge.s32.totalorder %s9, 4
    %s16 = sphi 0, %s28
    %s17 = sphi 0, %s24
    %s18 = sphi 0, %s16
    %s19 = sphi 0, %s17
    %s20 = sphi 0, %s18
    %s21 = sphi 0, %s19
    %s31 = sphi 0, %s33
    %s34 = sphi 0, %s31
    %s35 = sphi 0, %s34
    %s51 = sphi 0, %s35
    %s59 = sphi 0, %s61
    %s62 = sphi 0, %s59
    %s63 = sphi 0, %s62
    %s79 = sphi 0, %s63
    %s87 = sphi 0, %s89
    %s90 = sphi 0, %s87
    %s91 = sphi 0, %s90
    %s107 = sphi 0, %s91
    %s113 = sphi 0, %s115
    %s116 = sphi 0, %s113
    %s117 = sphi 0, %s116
    %s133 = sphi 0, %s117
  $region4: #{multi_head_self_attention.4} parent=0 // loop_header_branch
    %12 = sbr.rel (%p10) target = $region8
  $region5: #{multi_head_self_attention.4} parent=0 // loop_body
    %s14 = ssub.s32 %s9, 1
    %s15 = ssub.s32 %s9, 2
    %s22 = sadd.s32 1, %s17
    %p23 = scmp.ge.s32.totalorder %s22, 1
    %s24 = scalar_select %p23, 0, %s22
    %s25 = sadd.s32 1, %s16
    %s26 = scalar_select %p23, %s25, %s16
    %p27 = scmp.ge.s32.totalorder %s26, 2
    %s28 = scalar_select %p27, 0, %s26
    %s29 = ssub.s32 %s16, %s28
    %p30 = scmp.eq.s32.totalorder %s29, 0
    %s32 = sadd.s32 %s31, 1
    %s33 = scalar_select %p30, %s31, %s32
    %p36 = pneg %p30
    %p37 = scmp.eq.s32.totalorder %s9, 1
    %p38 = por %p36, %p37
    %p39 = scmp.ne.s32.totalorder %s31, %s34
    %p40 = scmp.eq.s32.totalorder %s9, 0
    %p41 = por %p39, %p40
    %p42 = scmp.ne.s32.totalorder %s31, %s34
    %p43 = scmp.eq.s32.totalorder %s14, 1
    %p44 = por %p42, %p43
    %p45 = scmp.ne.s32.totalorder %s34, %s35
    %p46 = scmp.eq.s32.totalorder %s14, 0
    %p47 = por %p45, %p46
    %p48 = scmp.ne.s32.totalorder %s34, %s35
    %p49 = scmp.eq.s32.totalorder %s15, 1
    %p50 = por %p48, %p49
    %p52 = scmp.ne.s32.totalorder %s35, %s51
    %p53 = scmp.eq.s32.totalorder %s15, 0
    %p54 = por %p52, %p53
    %s55 = ssub.s32 %s16, %s28
    %s56 = ssub.s32 %s17, %s24
    %s57 = sor.u32 %s55, %s56
    %p58 = scmp.eq.s32.totalorder %s57, 0
    %s60 = sadd.s32 %s59, 1
    %s61 = scalar_select %p58, %s59, %s60
    %p64 = pneg %p58
    %p65 = scmp.eq.s32.totalorder %s9, 1
    %p66 = por %p64, %p65
    %p67 = scmp.ne.s32.totalorder %s59, %s62
    %p68 = scmp.eq.s32.totalorder %s9, 0
    %p69 = por %p67, %p68
    %p70 = scmp.ne.s32.totalorder %s59, %s62
    %p71 = scmp.eq.s32.totalorder %s14, 1
    %p72 = por %p70, %p71
    %p73 = scmp.ne.s32.totalorder %s62, %s63
    %p74 = scmp.eq.s32.totalorder %s14, 0
    %p75 = por %p73, %p74
    %p76 = scmp.ne.s32.totalorder %s62, %s63
    %p77 = scmp.eq.s32.totalorder %s15, 1
    %p78 = por %p76, %p77
    %p80 = scmp.ne.s32.totalorder %s63, %s79
    %p81 = scmp.eq.s32.totalorder %s15, 0
    %p82 = por %p80, %p81
    %s83 = ssub.s32 %s16, %s28
    %s84 = ssub.s32 %s17, %s24
    %s85 = sor.u32 %s83, %s84
    %p86 = scmp.eq.s32.totalorder %s85, 0
    %s88 = sadd.s32 %s87, 1
    %s89 = scalar_select %p86, %s87, %s88
    %p92 = pneg %p86
    %p93 = scmp.eq.s32.totalorder %s9, 1
    %p94 = por %p92, %p93
    %p95 = scmp.ne.s32.totalorder %s87, %s90
    %p96 = scmp.eq.s32.totalorder %s9, 0
    %p97 = por %p95, %p96
    %p98 = scmp.ne.s32.totalorder %s87, %s90
    %p99 = scmp.eq.s32.totalorder %s14, 1
    %p100 = por %p98, %p99
    %p101 = scmp.ne.s32.totalorder %s90, %s91
    %p102 = scmp.eq.s32.totalorder %s14, 0
    %p103 = por %p101, %p102
    %p104 = scmp.ne.s32.totalorder %s90, %s91
    %p105 = scmp.eq.s32.totalorder %s15, 1
    %p106 = por %p104, %p105
    %p108 = scmp.ne.s32.totalorder %s91, %s107
    %p109 = scmp.eq.s32.totalorder %s15, 0
    %p110 = por %p108, %p109
    %s111 = ssub.s32 %s16, %s28
    %p112 = scmp.eq.s32.totalorder %s111, 0
    %s114 = sadd.s32 %s113, 1
    %s115 = scalar_select %p112, %s113, %s114
    %p118 = pneg %p112
    %p119 = scmp.eq.s32.totalorder %s9, 1
    %p120 = por %p118, %p119
    %p121 = scmp.ne.s32.totalorder %s113, %s116
    %p122 = scmp.eq.s32.totalorder %s9, 0
    %p123 = por %p121, %p122
    %p124 = scmp.ne.s32.totalorder %s113, %s116
    %p125 = scmp.eq.s32.totalorder %s14, 1
    %p126 = por %p124, %p125
    %p127 = scmp.ne.s32.totalorder %s116, %s117
    %p128 = scmp.eq.s32.totalorder %s14, 0
    %p129 = por %p127, %p128
    %p130 = scmp.ne.s32.totalorder %s116, %s117
    %p131 = scmp.eq.s32.totalorder %s15, 1
    %p132 = por %p130, %p131
    %p134 = scmp.ne.s32.totalorder %s117, %s133
    %p135 = scmp.eq.s32.totalorder %s15, 0
    %p136 = por %p134, %p135
    %p137 = scmp.le.s32.totalorder 1, %s9
    %p138 = scmp.lt.s32.totalorder %s9, 3
    %p139 = pnand %p137, %p138
    %p140 = pneg %p139
    // Predicated region
    $region9: #{multi_head_self_attention.4} parent=5 // pred_check
      _
    $region10: #{multi_head_self_attention.4} parent=5 // pred_check_branch
      %142 = sbr.rel (%p139) target = $region12
    $region11: #{multi_head_self_attention.4} parent=5 // pred_region
      %s143 = ssub.s32 %s9, 1
    $region12: #{multi_head_self_attention.4} parent=5 // pred_fallthru
      _
    %p144 = scmp.lt.s32.totalorder %s9, 2
    // Predicated region
    $region13: #{multi_head_self_attention.4} parent=5 // pred_check
      %p145 = pneg %p144
    $region14: #{multi_head_self_attention.4} parent=5 // pred_check_branch
      %147 = sbr.rel (%p145) target = $region16
    $region15: #{multi_head_self_attention.4} parent=5 // pred_region
      // Predicated region
      $region17: #{multi_head_self_attention.4} parent=15 // pred_check
        %p148 = pneg %p41
      $region18: #{multi_head_self_attention.4} parent=15 // pred_check_branch
        %150 = sbr.rel (%p148) target = $region20
      $region19: #{multi_head_self_attention.4} parent=15 // pred_region
        %p151 = scmp.lt.s32.totalorder %s16, 1
        %s152 = scalar_select %p151, %s16, 1
        %s153 = smul.addr %s152, 3
        %s154 = smul.addr %s153, 4
        %s155 = scalar_lea.vmem %s0, %s154
      $region20: #{multi_head_self_attention.4} parent=15 // pred_fallthru
        _
      // Predicated region
      $region21: #{multi_head_self_attention.4} parent=15 // pred_check
        %p156 = pneg %p69
      $region22: #{multi_head_self_attention.4} parent=15 // pred_check_branch
        %158 = sbr.rel (%p156) target = $region24
      $region23: #{multi_head_self_attention.4} parent=15 // pred_region
        %p159 = scmp.lt.s32.totalorder %s16, 1
        %s160 = scalar_select %p159, %s16, 1
        %p161 = scmp.lt.s32.totalorder %s17, 0
        %s162 = scalar_select %p161, %s17, 0
        %s163 = smul.addr %s162, 3
        %s164 = sadd.s32 1, %s163
        %s165 = smul.addr %s160, 3
        %s166 = sadd.s32 %s164, %s165
        %s167 = smul.addr %s166, 4
        %s168 = scalar_lea.vmem %s1, %s167
      $region24: #{multi_head_self_attention.4} parent=15 // pred_fallthru
        _
      // Predicated region
      $region25: #{multi_head_self_attention.4} parent=15 // pred_check
        %p169 = pneg %p97
      $region26: #{multi_head_self_attention.4} parent=15 // pred_check_branch
        %171 = sbr.rel (%p169) target = $region28
      $region27: #{multi_head_self_attention.4} parent=15 // pred_region
        %p172 = scmp.lt.s32.totalorder %s16, 1
        %s173 = scalar_select %p172, %s16, 1
        %p174 = scmp.lt.s32.totalorder %s17, 0
        %s175 = scalar_select %p174, %s17, 0
        %s176 = smul.addr %s175, 3
        %s177 = sadd.s32 2, %s176
        %s178 = smul.addr %s173, 3
        %s179 = sadd.s32 %s177, %s178
        %s180 = smul.addr %s179, 4
        %s181 = scalar_lea.vmem %s2, %s180
      $region28: #{multi_head_self_attention.4} parent=15 // pred_fallthru
        _
    $region16: #{multi_head_self_attention.4} parent=5 // pred_fallthru
      _
    %p182 = scmp.le.s32.totalorder 1, %s9
    %p183 = scmp.lt.s32.totalorder %s9, 3
    %p184 = pnand %p182, %p183
    %p185 = pneg %p184
    // Predicated region
    $region29: #{multi_head_self_attention.4} parent=5 // pred_check
      _
    $region30: #{multi_head_self_attention.4} parent=5 // pred_check_branch
      %187 = sbr.rel (%p184) target = $region32
    $region31: #{multi_head_self_attention.4} parent=5 // pred_region
      %s188 = ssub.s32 %s9, 1
      %p189 = scmp.lt.s32.totalorder %s18, 1
      %s190 = scalar_select %p189, %s18, 1
      %s191 = smul.addr %s190, 3
      %s192 = smul.addr %s191, 4
      %s193 = scalar_lea.vmem %s0, %s192
      %p194 = pneg %p47
      %p195 = pneg %p44
      %p196 = scmp.lt.s32.totalorder %s18, 1
      %s197 = scalar_select %p196, %s18, 1
      %p198 = scmp.lt.s32.totalorder %s19, 0
      %s199 = scalar_select %p198, %s19, 0
      %s200 = smul.addr %s199, 3
      %s201 = sadd.s32 1, %s200
      %s202 = smul.addr %s197, 3
      %s203 = sadd.s32 %s201, %s202
      %s204 = smul.addr %s203, 4
      %s205 = scalar_lea.vmem %s1, %s204
      %p206 = pneg %p75
      %p207 = pneg %p72
      %p208 = scmp.lt.s32.totalorder %s18, 1
      %s209 = scalar_select %p208, %s18, 1
      %p210 = scmp.lt.s32.totalorder %s19, 0
      %s211 = scalar_select %p210, %s19, 0
      %s212 = smul.addr %s211, 3
      %s213 = sadd.s32 2, %s212
      %s214 = smul.addr %s209, 3
      %s215 = sadd.s32 %s213, %s214
      %s216 = smul.addr %s215, 4
      %s217 = scalar_lea.vmem %s2, %s216
      %p218 = pneg %p103
      %p219 = pneg %p100
      %p220 = pneg %p129
      %p221 = pneg %p126
      %p222 = scmp.lt.s32.totalorder %s18, 1
      %s223 = scalar_select %p222, %s18, 1
      %s224 = smul.addr %s223, 4
      %s225 = scalar_lea.vmem %s3, %s224
      %p226 = scmp.lt.s32.totalorder %s18, 1
      %s227 = scalar_select %p226, %s18, 1
      %s228 = smul.addr %s227, 3
      %s229 = smul.addr %s228, 4
      %s230 = scalar_lea.vmem %s0, %s229
      %p231 = scmp.lt.s32.totalorder %s18, 1
      %s232 = scalar_select %p231, %s18, 1
      %p233 = scmp.lt.s32.totalorder %s19, 0
      %s234 = scalar_select %p233, %s19, 0
      %s235 = smul.addr %s234, 3
      %s236 = sadd.s32 1, %s235
      %s237 = smul.addr %s232, 3
      %s238 = sadd.s32 %s236, %s237
      %s239 = smul.addr %s238, 4
      %s240 = scalar_lea.vmem %s1, %s239
      %p241 = scmp.lt.s32.totalorder %s18, 1
      %s242 = scalar_select %p241, %s18, 1
      %p243 = scmp.lt.s32.totalorder %s19, 0
      %s244 = scalar_select %p243, %s19, 0
      %s245 = smul.addr %s244, 3
      %s246 = sadd.s32 2, %s245
      %s247 = smul.addr %s242, 3
      %s248 = sadd.s32 %s246, %s247
      %s249 = smul.addr %s248, 4
      %s250 = scalar_lea.vmem %s2, %s249
      %p251 = scmp.lt.s32.totalorder %s18, 1
      %s252 = scalar_select %p251, %s18, 1
      %s253 = smul.addr %s252, 4
      %s254 = scalar_lea.vmem %s3, %s253
      %p256 = scmp.eq.s32.totalorder %s19, 0
      // Predicated region
      $region33: #{multi_head_self_attention.4} parent=31 // pred_check
        %p257 = pneg %p256
      $region34: #{multi_head_self_attention.4} parent=31 // pred_check_branch
        %259 = sbr.rel (%p257) target = $region36
      $region35: #{multi_head_self_attention.4} parent=31 // pred_region
        %vm260 = vcmask 31744
        %261 = vst.msk [vmem:[#allocation2] sm:$0xff] %vm260, -inf
        %262 = vst.msk [vmem:[#allocation3] sm:$0xff] %vm260, 0.0
        %263 = vst [vmem:[#allocation4] sm:$0xff] 0.0
      $region36: #{multi_head_self_attention.4} parent=31 // pred_fallthru
        _
      %v264 = vld [vmem:[%s230] sm:$0xf]
      %v265 = vunpack.c.l.bf16 %v264
      %v266 = vmul.f32 %v265, 0.35351563
      %v267 = vpack.c.bf16 %v266, %v266
      %v268 = vld [vmem:[%s240] sm:$0xf]
      %v269 = vld [vmem:[%s250] sm:$0xf]
      %vm270 = vcmask 64512
      %v272 = vsel %vm270, %v267, 0
      %v275 = vsel %vm270, %v268, 0
      %277 = vmatpush.bf16.xpose.msra.mxu0 0
      %278 = vmatpush.bf16.xpose.msra.mxu0 0
      %279 = vmatpush.bf16.xpose.msra.mxu0 0
      %280 = vmatpush.bf16.xpose.msra.mxu0 0
      %281 = vmatpush.bf16.xpose.msra.mxu0 0
      %282 = vmatpush.bf16.xpose.msra.mxu0 0
      %283 = vmatpush.bf16.xpose.msra.mxu0 0
      %284 = vmatpush.bf16.xpose.msra.mxu0 %v275
      %285 = vmatmul.bf16.gmra.mxu0 %v272
      %v286 = vpop.f32.mrf.mxu0
      %v287 = vadd.f32 0.0, %v286
      %v288 = vpop.f32.mrf.mxu0
      %289 = vdwg.mxu0
      %v290 = vld [vmem:[#allocation2] sm:$0xff]
      %v291 = vld [vmem:[#allocation3] sm:$0xff]
      %v292 = vsel %vm270, %v287, -inf
      %293 = vmax.xlane.f32.xlu0 %v292
      %v294 = vpop.xlane.xlu0 %293
      %v295 = vmax.f32 %v290, %v294
      %v296 = vsub.f32 %v290, %v295
      %v297 = vmul.f32 %v296, 1.442695
      %v298 = vpow.pop %v297
      %300 = vset.pattern.permute.xlu0 0
      %301 = vperm.xlu0 %300, %v295
      %v302 = vpop.permute.xlu0 %301
      %v304 = vsub.f32 %v287, %v302
      %v305 = vmul.f32 %v304, 1.442695
      %v306 = vpow.pop %v305
      %v307 = vmul.f32 %v298, %v291
      %v308 = vsel %vm270, %v306, 0.0
      %309 = vadd.xlane.f32.xlu0 %v308
      %v310 = vpop.xlane.xlu0 %309
      %v311 = vadd.f32 %v307, %v310
      %vm312 = vcmask 7168
      %313 = vst.msk [vmem:[#allocation3] sm:$0xff] %vm312, %v311
      %v314 = vpack.c.bf16 %v306, %v306
      %v316 = vsel %vm270, %v314, 0
      %vm318 = vcmask 1043456
      %v320 = vsel %vm318, %v269, 0
      %322 = vmatpush.bf16.msra.mxu0 0
      %323 = vmatpush.bf16.msra.mxu0 0
      %324 = vmatpush.bf16.msra.mxu0 0
      %325 = vmatpush.bf16.msra.mxu0 0
      %326 = vmatpush.bf16.msra.mxu0 0
      %327 = vmatpush.bf16.msra.mxu0 0
      %328 = vmatpush.bf16.msra.mxu0 0
      %329 = vmatpush.bf16.msra.mxu0 %v320
      %330 = vmatmul.bf16.gmra.mxu0 %v316
      %v331 = vpop.f32.mrf.mxu0
      %v332 = vadd.f32 0.0, %v331
      %v333 = vpop.f32.mrf.mxu0
      %334 = vdwg.mxu0
      %v335 = vld [vmem:[#allocation4] sm:$0xff]
      %337 = vset.pattern.permute.xlu0 0
      %338 = vperm.xlu0 %337, %v298
      %v339 = vpop.permute.xlu0 %338
      %v341 = vmul.f32 %v339, %v335
      %v342 = vadd.f32 %v341, %v332
      %343 = vst.msk [vmem:[#allocation4] sm:$0xff] %vm270, %v342
      %344 = vst.msk [vmem:[#allocation2] sm:$0xff] %vm312, %v295
      %v345 = vld [vmem:[%s230] sm:$0xf]
      %v346 = vunpack.c.l.bf16 %v345
      %v347 = vmul.f32 %v346, 0.35351563
      %v348 = vpack.c.bf16 %v347, %v347
      %v349 = vld [vmem:[%s240] sm:$0xf]
      %v350 = vld [vmem:[%s250] sm:$0xf]
      %352 = vrot.lane.b32.xlu0 %v348, 120
      %v353 = vpop.permute.xlu0 %352
      %v355 = vunpack.c.l.b16 %v349
      %v356 = vpack.c.b16 %v355, %v355
      %357 = vrot.lane.b32.xlu0 %v356, 120
      %v358 = vpop.permute.xlu0 %357
      %v360 = vsel %vm270, %v353, 0
      %v363 = vsel %vm270, %v358, 0
      %365 = vmatpush.bf16.xpose.msra.mxu0 0
      %366 = vmatpush.bf16.xpose.msra.mxu0 0
      %367 = vmatpush.bf16.xpose.msra.mxu0 0
      %368 = vmatpush.bf16.xpose.msra.mxu0 0
      %369 = vmatpush.bf16.xpose.msra.mxu0 0
      %370 = vmatpush.bf16.xpose.msra.mxu0 0
      %371 = vmatpush.bf16.xpose.msra.mxu0 0
      %372 = vmatpush.bf16.xpose.msra.mxu0 %v363
      %373 = vmatmul.bf16.gmra.mxu0 %v360
      %v374 = vpop.f32.mrf.mxu0
      %v375 = vadd.f32 0.0, %v374
      %v376 = vpop.f32.mrf.mxu0
      %377 = vdwg.mxu0
      %v378 = vld [vmem:[#allocation2] sm:$0xff]
      %v379 = vld [vmem:[#allocation3] sm:$0xff]
      %v380 = vsel %vm270, %v375, -inf
      %381 = vmax.xlane.f32.xlu0 %v380
      %v382 = vpop.xlane.xlu0 %381
      %v383 = vmax.f32 %v378, %v382
      %v384 = vsub.f32 %v378, %v383
      %v385 = vmul.f32 %v384, 1.442695
      %v386 = vpow.pop %v385
      %388 = vset.pattern.permute.xlu0 1
      %389 = vperm.xlu0 %388, %v383
      %v390 = vpop.permute.xlu0 %389
      %v392 = vsub.f32 %v375, %v390
      %v393 = vmul.f32 %v392, 1.442695
      %v394 = vpow.pop %v393
      %v395 = vmul.f32 %v386, %v379
      %v396 = vsel %vm270, %v394, 0.0
      %397 = vadd.xlane.f32.xlu0 %v396
      %v398 = vpop.xlane.xlu0 %397
      %v399 = vadd.f32 %v395, %v398
      %vm400 = vcmask 15368
      %401 = vst.msk [vmem:[#allocation3] sm:$0xff] %vm400, %v399
      %v402 = vpack.c.bf16 %v394, %v394
      %v404 = vunpack.c.l.b16 %v350
      %v405 = vpack.c.b16 %v404, %v404
      %406 = vrot.lane.b32.xlu0 %v405, 120
      %v407 = vpop.permute.xlu0 %406
      %v409 = vsel %vm270, %v402, 0
      %v412 = vsel %vm318, %v407, 0
      %414 = vmatpush.bf16.msra.mxu0 0
      %415 = vmatpush.bf16.msra.mxu0 0
      %416 = vmatpush.bf16.msra.mxu0 0
      %417 = vmatpush.bf16.msra.mxu0 0
      %418 = vmatpush.bf16.msra.mxu0 0
      %419 = vmatpush.bf16.msra.mxu0 0
      %420 = vmatpush.bf16.msra.mxu0 0
      %421 = vmatpush.bf16.msra.mxu0 %v412
      %422 = vmatmul.bf16.gmra.mxu0 %v409
      %v423 = vpop.f32.mrf.mxu0
      %v424 = vadd.f32 0.0, %v423
      %v425 = vpop.f32.mrf.mxu0
      %426 = vdwg.mxu0
      %v427 = vld [vmem:[#allocation4] sm:$0xff]
      %429 = vset.pattern.permute.xlu0 1
      %430 = vperm.xlu0 %429, %v386
      %v431 = vpop.permute.xlu0 %430
      %v433 = vmul.f32 %v431, %v427
      %435 = vrot.lane.b32.xlu0 %v424, 8
      %v436 = vpop.permute.xlu0 %435
      %v438 = vadd.f32 %v433, %v436
      %vm439 = vcmask 130112
      %440 = vst.msk [vmem:[#allocation4] sm:$0xff] %vm439, %v438
      %441 = vst.msk [vmem:[#allocation2] sm:$0xff] %vm400, %v383
      %v442 = vld [vmem:[%s230] sm:$0xf]
      %v443 = vunpack.c.l.bf16 %v442
      %v444 = vmul.f32 %v443, 0.35351563
      %v445 = vpack.c.bf16 %v444, %v444
      %v446 = vld [vmem:[%s240] sm:$0xf]
      %v447 = vld [vmem:[%s250] sm:$0xf]
      %449 = vrot.lane.b32.xlu0 %v445, 112
      %v450 = vpop.permute.xlu0 %449
      %v452 = vunpack.c.l.b16 %v446
      %v453 = vpack.c.b16 %v452, %v452
      %454 = vrot.lane.b32.xlu0 %v453, 112
      %v455 = vpop.permute.xlu0 %454
      %v457 = vsel %vm270, %v450, 0
      %v460 = vsel %vm270, %v455, 0
      %462 = vmatpush.bf16.xpose.msra.mxu0 0
      %463 = vmatpush.bf16.xpose.msra.mxu0 0
      %464 = vmatpush.bf16.xpose.msra.mxu0 0
      %465 = vmatpush.bf16.xpose.msra.mxu0 0
      %466 = vmatpush.bf16.xpose.msra.mxu0 0
      %467 = vmatpush.bf16.xpose.msra.mxu0 0
      %468 = vmatpush.bf16.xpose.msra.mxu0 0
      %469 = vmatpush.bf16.xpose.msra.mxu0 %v460
      %470 = vmatmul.bf16.gmra.mxu0 %v457
      %v471 = vpop.f32.mrf.mxu0
      %v472 = vadd.f32 0.0, %v471
      %v473 = vpop.f32.mrf.mxu0
      %474 = vdwg.mxu0
      %v475 = vld [vmem:[#allocation2] sm:$0xff]
      %v476 = vld [vmem:[#allocation3] sm:$0xff]
      %v477 = vsel %vm270, %v472, -inf
      %478 = vmax.xlane.f32.xlu0 %v477
      %v479 = vpop.xlane.xlu0 %478
      %v480 = vmax.f32 %v475, %v479
      %v481 = vsub.f32 %v475, %v480
      %v482 = vmul.f32 %v481, 1.442695
      %v483 = vpow.pop %v482
      %485 = vset.pattern.permute.xlu0 2
      %486 = vperm.xlu0 %485, %v480
      %v487 = vpop.permute.xlu0 %486
      %v489 = vsub.f32 %v472, %v487
      %v490 = vmul.f32 %v489, 1.442695
      %v491 = vpow.pop %v490
      %v492 = vmul.f32 %v483, %v476
      %v493 = vsel %vm270, %v491, 0.0
      %494 = vadd.xlane.f32.xlu0 %v493
      %v495 = vpop.xlane.xlu0 %494
      %v496 = vadd.f32 %v492, %v495
      %vm497 = vcmask 23568
      %498 = vst.msk [vmem:[#allocation3] sm:$0xff] %vm497, %v496
      %v499 = vpack.c.bf16 %v491, %v491
      %v501 = vunpack.c.l.b16 %v447
      %v502 = vpack.c.b16 %v501, %v501
      %503 = vrot.lane.b32.xlu0 %v502, 112
      %v504 = vpop.permute.xlu0 %503
      %v506 = vsel %vm270, %v499, 0
      %v509 = vsel %vm318, %v504, 0
      %511 = vmatpush.bf16.msra.mxu0 0
      %512 = vmatpush.bf16.msra.mxu0 0
      %513 = vmatpush.bf16.msra.mxu0 0
      %514 = vmatpush.bf16.msra.mxu0 0
      %515 = vmatpush.bf16.msra.mxu0 0
      %516 = vmatpush.bf16.msra.mxu0 0
      %517 = vmatpush.bf16.msra.mxu0 0
      %518 = vmatpush.bf16.msra.mxu0 %v509
      %519 = vmatmul.bf16.gmra.mxu0 %v506
      %v520 = vpop.f32.mrf.mxu0
      %v521 = vadd.f32 0.0, %v520
      %v522 = vpop.f32.mrf.mxu0
      %523 = vdwg.mxu0
      %v524 = vld [vmem:[#allocation4] sm:$0xff]
      %526 = vset.pattern.permute.xlu0 2
      %527 = vperm.xlu0 %526, %v483
      %v528 = vpop.permute.xlu0 %527
      %v530 = vmul.f32 %v528, %v524
      %532 = vrot.lane.b32.xlu0 %v521, 16
      %v533 = vpop.permute.xlu0 %532
      %v535 = vadd.f32 %v530, %v533
      %vm536 = vcmask 195712
      %537 = vst.msk [vmem:[#allocation4] sm:$0xff] %vm536, %v535
      %538 = vst.msk [vmem:[#allocation2] sm:$0xff] %vm497, %v480
      %v539 = vld [vmem:[%s230] sm:$0xf]
      %v540 = vunpack.c.l.bf16 %v539
      %v541 = vmul.f32 %v540, 0.35351563
      %v542 = vpack.c.bf16 %v541, %v541
      %v543 = vld [vmem:[%s240] sm:$0xf]
      %v544 = vld [vmem:[%s250] sm:$0xf]
      %546 = vrot.lane.b32.xlu0 %v542, 104
      %v547 = vpop.permute.xlu0 %546
      %v549 = vunpack.c.l.b16 %v543
      %v550 = vpack.c.b16 %v549, %v549
      %551 = vrot.lane.b32.xlu0 %v550, 104
      %v552 = vpop.permute.xlu0 %551
      %v554 = vsel %vm270, %v547, 0
      %v557 = vsel %vm270, %v552, 0
      %559 = vmatpush.bf16.xpose.msra.mxu0 0
      %560 = vmatpush.bf16.xpose.msra.mxu0 0
      %561 = vmatpush.bf16.xpose.msra.mxu0 0
      %562 = vmatpush.bf16.xpose.msra.mxu0 0
      %563 = vmatpush.bf16.xpose.msra.mxu0 0
      %564 = vmatpush.bf16.xpose.msra.mxu0 0
      %565 = vmatpush.bf16.xpose.msra.mxu0 0
      %566 = vmatpush.bf16.xpose.msra.mxu0 %v557
      %567 = vmatmul.bf16.gmra.mxu0 %v554
      %v568 = vpop.f32.mrf.mxu0
      %v569 = vadd.f32 0.0, %v568
      %v570 = vpop.f32.mrf.mxu0
      %571 = vdwg.mxu0
      %v572 = vld [vmem:[#allocation2] sm:$0xff]
      %v573 = vld [vmem:[#allocation3] sm:$0xff]
      %v574 = vsel %vm270, %v569, -inf
      %575 = vmax.xlane.f32.xlu0 %v574
      %v576 = vpop.xlane.xlu0 %575
      %v577 = vmax.f32 %v572, %v576
      %v578 = vsub.f32 %v572, %v577
      %v579 = vmul.f32 %v578, 1.442695
      %v580 = vpow.pop %v579
      %582 = vset.pattern.permute.xlu0 3
      %583 = vperm.xlu0 %582, %v577
      %v584 = vpop.permute.xlu0 %583
      %v586 = vsub.f32 %v569, %v584
      %v587 = vmul.f32 %v586, 1.442695
      %v588 = vpow.pop %v587
      %v589 = vmul.f32 %v580, %v573
      %v590 = vsel %vm270, %v588, 0.0
      %591 = vadd.xlane.f32.xlu0 %v590
      %v592 = vpop.xlane.xlu0 %591
      %v593 = vadd.f32 %v589, %v592
      %vm594 = vcmask 31768
      %595 = vst.msk [vmem:[#allocation3] sm:$0xff] %vm594, %v593
      %v596 = vpack.c.bf16 %v588, %v588
      %v598 = vunpack.c.l.b16 %v544
      %v599 = vpack.c.b16 %v598, %v598
      %600 = vrot.lane.b32.xlu0 %v599, 104
      %v601 = vpop.permute.xlu0 %600
      %v603 = vsel %vm270, %v596, 0
      %v606 = vsel %vm318, %v601, 0
      %608 = vmatpush.bf16.msra.mxu0 0
      %609 = vmatpush.bf16.msra.mxu0 0
      %610 = vmatpush.bf16.msra.mxu0 0
      %611 = vmatpush.bf16.msra.mxu0 0
      %612 = vmatpush.bf16.msra.mxu0 0
      %613 = vmatpush.bf16.msra.mxu0 0
      %614 = vmatpush.bf16.msra.mxu0 0
      %615 = vmatpush.bf16.msra.mxu0 %v606
      %616 = vmatmul.bf16.gmra.mxu0 %v603
      %v617 = vpop.f32.mrf.mxu0
      %v618 = vadd.f32 0.0, %v617
      %v619 = vpop.f32.mrf.mxu0
      %620 = vdwg.mxu0
      %v621 = vld [vmem:[#allocation4] sm:$0xff]
      %623 = vset.pattern.permute.xlu0 3
      %624 = vperm.xlu0 %623, %v580
      %v625 = vpop.permute.xlu0 %624
      %v627 = vmul.f32 %v625, %v621
      %629 = vrot.lane.b32.xlu0 %v618, 24
      %v630 = vpop.permute.xlu0 %629
      %v632 = vadd.f32 %v627, %v630
      %vm633 = vcmask 261312
      %634 = vst.msk [vmem:[#allocation4] sm:$0xff] %vm633, %v632
      %635 = vst.msk [vmem:[#allocation2] sm:$0xff] %vm594, %v577
      // Predicated region
      $region37: #{multi_head_self_attention.4} parent=31 // pred_check
        %p636 = pneg %p256
      $region38: #{multi_head_self_attention.4} parent=31 // pred_check_branch
        %638 = sbr.rel (%p636) target = $region40
      $region39: #{multi_head_self_attention.4} parent=31 // pred_region
        %v639 = vld [vmem:[#allocation3] sm:$0xff]
        %v640 = vrcp.pop %v639
        %v641 = vld [vmem:[#allocation4] sm:$0xff]
        %643 = vset.pattern.permute.xlu0 0
        %644 = vperm.xlu0 %643, %v640
        %v645 = vpop.permute.xlu0 %644
        %v647 = vmul.f32 %v641, %v645
        %v648 = vpack.c.bf16 %v647, %v647
        %649 = vset.pattern.permute.xlu0 1
        %650 = vperm.xlu0 %649, %v640
        %v651 = vpop.permute.xlu0 %650
        %v653 = vmul.f32 %v641, %v651
        %v654 = vpack.c.bf16 %v653, %v653
        %655 = vset.pattern.permute.xlu0 2
        %656 = vperm.xlu0 %655, %v640
        %v657 = vpop.permute.xlu0 %656
        %v659 = vmul.f32 %v641, %v657
        %v660 = vpack.c.bf16 %v659, %v659
        %661 = vset.pattern.permute.xlu0 3
        %662 = vperm.xlu0 %661, %v640
        %v663 = vpop.permute.xlu0 %662
        %v665 = vmul.f32 %v641, %v663
        %v666 = vpack.c.bf16 %v665, %v665
        %v669 = vsel %vm270, %v648, %v654
        %vm670 = vcmask 130048
        %v672 = vsel %vm670, %v669, %v660
        %vm673 = vcmask 195584
        %v675 = vsel %vm673, %v672, %v666
        %vm676 = vcmask 261120
        %v678 = vsel %vm676, %v675, 0
        %680 = vst [vmem:[%s254] sm:$0xf] %v678
      $region40: #{multi_head_self_attention.4} parent=31 // pred_fallthru
        _
      %p681 = scmp.lt.s32.totalorder %s18, 1
      %s682 = scalar_select %p681, %s18, 1
      %s683 = smul.addr %s682, 4
      %s684 = scalar_lea.vmem %s3, %s683
      // Predicated region
      $region41: #{multi_head_self_attention.4} parent=31 // pred_check
        %p685 = pneg %p126
      $region42: #{multi_head_self_attention.4} parent=31 // pred_check_branch
        %687 = sbr.rel (%p685) target = $region44
      $region43: #{multi_head_self_attention.4} parent=31 // pred_region
        _
      $region44: #{multi_head_self_attention.4} parent=31 // pred_fallthru
        _
    $region32: #{multi_head_self_attention.4} parent=5 // pred_fallthru
      _
    %p688 = scmp.le.s32.totalorder 2, %s9
    // Predicated region
    $region45: #{multi_head_self_attention.4} parent=5 // pred_check
      %p689 = pneg %p688
    $region46: #{multi_head_self_attention.4} parent=5 // pred_check_branch
      %691 = sbr.rel (%p689) target = $region48
    $region47: #{multi_head_self_attention.4} parent=5 // pred_region
      %s692 = ssub.s32 %s9, 2
      // Predicated region
      $region49: #{multi_head_self_attention.4} parent=47 // pred_check
        %p693 = pneg %p132
      $region50: #{multi_head_self_attention.4} parent=47 // pred_check_branch
        %695 = sbr.rel (%p693) target = $region52
      $region51: #{multi_head_self_attention.4} parent=47 // pred_region
        %p696 = scmp.lt.s32.totalorder %s20, 1
        %s697 = scalar_select %p696, %s20, 1
        %s698 = smul.addr %s697, 4
        %s699 = scalar_lea.vmem %s3, %s698
      $region52: #{multi_head_self_attention.4} parent=47 // pred_fallthru
        _
    $region48: #{multi_head_self_attention.4} parent=5 // pred_fallthru
      _
  $region6: #{multi_head_self_attention.4} parent=0 // loop_footer
    %s13 = sadd.s32 1, %s9
  $region7: #{multi_head_self_attention.4} parent=0 // loop_footer_branch
    %8 = sbr.rel target = $region3
  $region8: #{multi_head_self_attention.4} parent=0 // loop_exit
    _

// kernel: multi_head_self_attention.5
$region0: #{multi_head_self_attention.5}
  #allocation0 [shape = 'u32[]', space=smem, size = 0x4, offset = 0x4, fixed_abs, tag = 'smem constant byte address 0x4 - core index']
  #allocation1 [shape = 'u32[72,128]{1,0:T(1,128)}', space=vmem, size = 0x9000, scoped, tag = 'internal scratch']
  %s0 = inlined_call_operand.vmem [shape: bf16[16,128], index: 0, kind: input, shape index: {}]
  %s1 = inlined_call_operand.vmem [shape: bf16[128,128], index: 1, kind: input, shape index: {}]
  %s2 = inlined_call_operand.vmem [shape: f32[1,128], index: 2, kind: input, shape index: {}]
  %s3 = inlined_call_operand.vmem [shape: f32[16,128], index: 3, kind: output, shape index: {}]
  %s4 = sld [smem:[#allocation0]]
  $region45: #{multi_head_self_attention.5} parent=0
    _
  %s6 = ssub.s32 1, %s4
  %s7 = scalar_select 0, %s6, %s4
  loop: start=0, step=1, limit=4
  $region2: #{multi_head_self_attention.5} parent=0 // loop_pre_header
    _
  $region3: #{multi_head_self_attention.5} parent=0 // loop_header
    %s9 = sphi 0, %s13
    %p10 = scmp.ge.s32.totalorder %s9, 4
    %s16 = sphi 0, %s28
    %s17 = sphi 0, %s24
    %s18 = sphi 0, %s16
    %s19 = sphi 0, %s17
    %s20 = sphi 0, %s18
    %s21 = sphi 0, %s19
    %s31 = sphi 0, %s33
    %s34 = sphi 0, %s31
    %s35 = sphi 0, %s34
    %s51 = sphi 0, %s35
    %s57 = sphi 0, %s59
    %s60 = sphi 0, %s57
    %s61 = sphi 0, %s60
    %s77 = sphi 0, %s61
    %s83 = sphi 0, %s85
    %s86 = sphi 0, %s83
    %s87 = sphi 0, %s86
    %s103 = sphi 0, %s87
    %s111 = sphi 0, %s113
    %s114 = sphi 0, %s111
    %s115 = sphi 0, %s114
    %s131 = sphi 0, %s115
  $region4: #{multi_head_self_attention.5} parent=0 // loop_header_branch
    %12 = sbr.rel (%p10) target = $region8
  $region5: #{multi_head_self_attention.5} parent=0 // loop_body
    %s14 = ssub.s32 %s9, 1
    %s15 = ssub.s32 %s9, 2
    %s22 = sadd.s32 1, %s17
    %p23 = scmp.ge.s32.totalorder %s22, 2
    %s24 = scalar_select %p23, 0, %s22
    %s25 = sadd.s32 1, %s16
    %s26 = scalar_select %p23, %s25, %s16
    %p27 = scmp.ge.s32.totalorder %s26, 1
    %s28 = scalar_select %p27, 0, %s26
    %s29 = ssub.s32 %s17, %s24
    %p30 = scmp.eq.s32.totalorder %s29, 0
    %s32 = sadd.s32 %s31, 1
    %s33 = scalar_select %p30, %s31, %s32
    %p36 = pneg %p30
    %p37 = scmp.eq.s32.totalorder %s9, 1
    %p38 = por %p36, %p37
    %p39 = scmp.ne.s32.totalorder %s31, %s34
    %p40 = scmp.eq.s32.totalorder %s9, 0
    %p41 = por %p39, %p40
    %p42 = scmp.ne.s32.totalorder %s31, %s34
    %p43 = scmp.eq.s32.totalorder %s14, 1
    %p44 = por %p42, %p43
    %p45 = scmp.ne.s32.totalorder %s34, %s35
    %p46 = scmp.eq.s32.totalorder %s14, 0
    %p47 = por %p45, %p46
    %p48 = scmp.ne.s32.totalorder %s34, %s35
    %p49 = scmp.eq.s32.totalorder %s15, 1
    %p50 = por %p48, %p49
    %p52 = scmp.ne.s32.totalorder %s35, %s51
    %p53 = scmp.eq.s32.totalorder %s15, 0
    %p54 = por %p52, %p53
    %s55 = ssub.s32 %s16, %s28
    %p56 = scmp.eq.s32.totalorder %s55, 0
    %s58 = sadd.s32 %s57, 1
    %s59 = scalar_select %p56, %s57, %s58
    %p62 = pneg %p56
    %p63 = scmp.eq.s32.totalorder %s9, 1
    %p64 = por %p62, %p63
    %p65 = scmp.ne.s32.totalorder %s57, %s60
    %p66 = scmp.eq.s32.totalorder %s9, 0
    %p67 = por %p65, %p66
    %p68 = scmp.ne.s32.totalorder %s57, %s60
    %p69 = scmp.eq.s32.totalorder %s14, 1
    %p70 = por %p68, %p69
    %p71 = scmp.ne.s32.totalorder %s60, %s61
    %p72 = scmp.eq.s32.totalorder %s14, 0
    %p73 = por %p71, %p72
    %p74 = scmp.ne.s32.totalorder %s60, %s61
    %p75 = scmp.eq.s32.totalorder %s15, 1
    %p76 = por %p74, %p75
    %p78 = scmp.ne.s32.totalorder %s61, %s77
    %p79 = scmp.eq.s32.totalorder %s15, 0
    %p80 = por %p78, %p79
    %s81 = ssub.s32 %s16, %s28
    %p82 = scmp.eq.s32.totalorder %s81, 0
    %s84 = sadd.s32 %s83, 1
    %s85 = scalar_select %p82, %s83, %s84
    %p88 = pneg %p82
    %p89 = scmp.eq.s32.totalorder %s9, 1
    %p90 = por %p88, %p89
    %p91 = scmp.ne.s32.totalorder %s83, %s86
    %p92 = scmp.eq.s32.totalorder %s9, 0
    %p93 = por %p91, %p92
    %p94 = scmp.ne.s32.totalorder %s83, %s86
    %p95 = scmp.eq.s32.totalorder %s14, 1
    %p96 = por %p94, %p95
    %p97 = scmp.ne.s32.totalorder %s86, %s87
    %p98 = scmp.eq.s32.totalorder %s14, 0
    %p99 = por %p97, %p98
    %p100 = scmp.ne.s32.totalorder %s86, %s87
    %p101 = scmp.eq.s32.totalorder %s15, 1
    %p102 = por %p100, %p101
    %p104 = scmp.ne.s32.totalorder %s87, %s103
    %p105 = scmp.eq.s32.totalorder %s15, 0
    %p106 = por %p104, %p105
    %s107 = ssub.s32 %s17, %s24
    %s108 = ssub.s32 %s16, %s28
    %s109 = sor.u32 %s107, %s108
    %p110 = scmp.eq.s32.totalorder %s109, 0
    %s112 = sadd.s32 %s111, 1
    %s113 = scalar_select %p110, %s111, %s112
    %p116 = pneg %p110
    %p117 = scmp.eq.s32.totalorder %s9, 1
    %p118 = por %p116, %p117
    %p119 = scmp.ne.s32.totalorder %s111, %s114
    %p120 = scmp.eq.s32.totalorder %s9, 0
    %p121 = por %p119, %p120
    %p122 = scmp.ne.s32.totalorder %s111, %s114
    %p123 = scmp.eq.s32.totalorder %s14, 1
    %p124 = por %p122, %p123
    %p125 = scmp.ne.s32.totalorder %s114, %s115
    %p126 = scmp.eq.s32.totalorder %s14, 0
    %p127 = por %p125, %p126
    %p128 = scmp.ne.s32.totalorder %s114, %s115
    %p129 = scmp.eq.s32.totalorder %s15, 1
    %p130 = por %p128, %p129
    %p132 = scmp.ne.s32.totalorder %s115, %s131
    %p133 = scmp.eq.s32.totalorder %s15, 0
    %p134 = por %p132, %p133
    %p135 = scmp.le.s32.totalorder 1, %s9
    %p136 = scmp.lt.s32.totalorder %s9, 3
    %p137 = pnand %p135, %p136
    %p138 = pneg %p137
    // Predicated region
    $region9: #{multi_head_self_attention.5} parent=5 // pred_check
      _
    $region10: #{multi_head_self_attention.5} parent=5 // pred_check_branch
      %140 = sbr.rel (%p137) target = $region12
    $region11: #{multi_head_self_attention.5} parent=5 // pred_region
      %s141 = ssub.s32 %s9, 1
      // Predicated region
      $region13: #{multi_head_self_attention.5} parent=11 // pred_check
        %p142 = pneg %p73
      $region14: #{multi_head_self_attention.5} parent=11 // pred_check_branch
        %144 = sbr.rel (%p142) target = $region16
      $region15: #{multi_head_self_attention.5} parent=11 // pred_region
        %p145 = scmp.lt.s32.totalorder %s18, 0
        %s146 = scalar_select %p145, %s18, 0
        %s147 = smul.addr %s146, 4
        %s148 = scalar_lea.vmem %s1, %s147
      $region16: #{multi_head_self_attention.5} parent=11 // pred_fallthru
        _
      // Predicated region
      $region17: #{multi_head_self_attention.5} parent=11 // pred_check
        %p149 = pneg %p99
      $region18: #{multi_head_self_attention.5} parent=11 // pred_check_branch
        %151 = sbr.rel (%p149) target = $region20
      $region19: #{multi_head_self_attention.5} parent=11 // pred_region
        %p152 = scmp.lt.s32.totalorder %s18, 0
        %s153 = scalar_select %p152, %s18, 0
        %s154 = scalar_lea.vmem %s2, %s153
      $region20: #{multi_head_self_attention.5} parent=11 // pred_fallthru
        _
    $region12: #{multi_head_self_attention.5} parent=5 // pred_fallthru
      _
    %p155 = scmp.lt.s32.totalorder %s9, 2
    // Predicated region
    $region21: #{multi_head_self_attention.5} parent=5 // pred_check
      %p156 = pneg %p155
    $region22: #{multi_head_self_attention.5} parent=5 // pred_check_branch
      %158 = sbr.rel (%p156) target = $region24
    $region23: #{multi_head_self_attention.5} parent=5 // pred_region
      // Predicated region
      $region25: #{multi_head_self_attention.5} parent=23 // pred_check
        %p159 = pneg %p41
      $region26: #{multi_head_self_attention.5} parent=23 // pred_check_branch
        %161 = sbr.rel (%p159) target = $region28
      $region27: #{multi_head_self_attention.5} parent=23 // pred_region
        %p162 = scmp.lt.s32.totalorder %s17, 1
        %s163 = scalar_select %p162, %s17, 1
        %s164 = smul.addr %s163, 4
        %s165 = scalar_lea.vmem %s0, %s164
      $region28: #{multi_head_self_attention.5} parent=23 // pred_fallthru
        _
    $region24: #{multi_head_self_attention.5} parent=5 // pred_fallthru
      _
    %p166 = scmp.le.s32.totalorder 1, %s9
    %p167 = scmp.lt.s32.totalorder %s9, 3
    %p168 = pnand %p166, %p167
    %p169 = pneg %p168
    // Predicated region
    $region29: #{multi_head_self_attention.5} parent=5 // pred_check
      _
    $region30: #{multi_head_self_attention.5} parent=5 // pred_check_branch
      %171 = sbr.rel (%p168) target = $region32
    $region31: #{multi_head_self_attention.5} parent=5 // pred_region
      %s172 = ssub.s32 %s9, 1
      %p173 = scmp.lt.s32.totalorder %s19, 1
      %s174 = scalar_select %p173, %s19, 1
      %s175 = smul.addr %s174, 4
      %s176 = scalar_lea.vmem %s0, %s175
      %p177 = pneg %p47
      %p178 = pneg %p44
      %p179 = scmp.lt.s32.totalorder %s18, 0
      %s180 = scalar_select %p179, %s18, 0
      %s181 = smul.addr %s180, 4
      %s182 = scalar_lea.vmem %s1, %s181
      %p183 = pneg %p73
      %p184 = pneg %p70
      %p185 = scmp.lt.s32.totalorder %s18, 0
      %s186 = scalar_select %p185, %s18, 0
      %s187 = scalar_lea.vmem %s2, %s186
      %p188 = pneg %p99
      %p189 = pneg %p96
      %p190 = pneg %p127
      %p191 = pneg %p124
      %p192 = scmp.lt.s32.totalorder %s19, 1
      %s193 = scalar_select %p192, %s19, 1
      %p194 = scmp.lt.s32.totalorder %s18, 0
      %s195 = scalar_select %p194, %s18, 0
      %s196 = sadd.s32 %s195, %s193
      %s197 = smul.addr %s196, 8
      %s198 = scalar_lea.vmem %s3, %s197
      %p199 = scmp.lt.s32.totalorder %s19, 1
      %s200 = scalar_select %p199, %s19, 1
      %s201 = smul.addr %s200, 4
      %s202 = scalar_lea.vmem %s0, %s201
      %p203 = scmp.lt.s32.totalorder %s18, 0
      %s204 = scalar_select %p203, %s18, 0
      %s205 = smul.addr %s204, 4
      %s206 = scalar_lea.vmem %s1, %s205
      %p207 = scmp.lt.s32.totalorder %s18, 0
      %s208 = scalar_select %p207, %s18, 0
      %s209 = scalar_lea.vmem %s2, %s208
      %p210 = scmp.lt.s32.totalorder %s19, 1
      %s211 = scalar_select %p210, %s19, 1
      %p212 = scmp.lt.s32.totalorder %s18, 0
      %s213 = scalar_select %p212, %s18, 0
      %s214 = sadd.s32 %s213, %s211
      %s215 = smul.addr %s214, 8
      %s216 = scalar_lea.vmem %s3, %s215
      %v217 = vld [vmem:[%s202] sm:$0xf]
      %v218 = vld [vmem:[%s206] sm:$0xf]
      %v219 = vld [vmem:[%s206 + $0x4] sm:$0xf]
      %v220 = vld [vmem:[%s206 + $0x8] sm:$0xf]
      %v221 = vld [vmem:[%s206 + $0xc] sm:$0xf]
      %v222 = vld [vmem:[%s206 + $0x10] sm:$0xf]
      %v223 = vld [vmem:[%s206 + $0x14] sm:$0xf]
      %v224 = vld [vmem:[%s206 + $0x18] sm:$0xf]
      %v225 = vld [vmem:[%s206 + $0x1c] sm:$0xf]
      %v226 = vld [vmem:[%s206 + $0x20] sm:$0xf]
      %v227 = vld [vmem:[%s206 + $0x24] sm:$0xf]
      %v228 = vld [vmem:[%s206 + $0x28] sm:$0xf]
      %v229 = vld [vmem:[%s206 + $0x2c] sm:$0xf]
      %v230 = vld [vmem:[%s206 + $0x30] sm:$0xf]
      %v231 = vld [vmem:[%s206 + $0x34] sm:$0xf]
      %v232 = vld [vmem:[%s206 + $0x38] sm:$0xf]
      %v233 = vld [vmem:[%s206 + $0x3c] sm:$0xf]
      %v234 = vld [vmem:[%s209] sm:$0x1]
      %v236 = vperm.slane %v234, 0
      %v254 = vunpack.c.l.b16 %v218
      %v255 = vunpack.c.l.b16 %v219
      %v256 = vunpack.c.l.b16 %v220
      %v257 = vunpack.c.l.b16 %v221
      %v258 = vunpack.c.l.b16 %v222
      %v259 = vunpack.c.l.b16 %v223
      %v260 = vunpack.c.l.b16 %v224
      %v261 = vunpack.c.l.b16 %v225
      %v262 = vunpack.c.l.b16 %v226
      %v263 = vunpack.c.l.b16 %v227
      %v264 = vunpack.c.l.b16 %v228
      %v265 = vunpack.c.l.b16 %v229
      %v266 = vunpack.c.l.b16 %v230
      %v267 = vunpack.c.l.b16 %v231
      %v268 = vunpack.c.l.b16 %v232
      %v269 = vunpack.c.l.b16 %v233
      %v270 = vpack.c.b16 %v255, %v254
      %v271 = vpack.c.b16 %v257, %v256
      %v272 = vpack.c.b16 %v259, %v258
      %v273 = vpack.c.b16 %v261, %v260
      %v274 = vpack.c.b16 %v263, %v262
      %v275 = vpack.c.b16 %v265, %v264
      %v276 = vpack.c.b16 %v267, %v266
      %v277 = vpack.c.b16 %v269, %v268
      %286 = vmatpush.bf16.msra.mxu0 %v277
      %287 = vmatpush.bf16.msra.mxu0 %v276
      %288 = vmatpush.bf16.msra.mxu0 %v275
      %289 = vmatpush.bf16.msra.mxu0 %v274
      %290 = vmatpush.bf16.msra.mxu0 %v273
      %291 = vmatpush.bf16.msra.mxu0 %v272
      %292 = vmatpush.bf16.msra.mxu0 %v271
      %293 = vmatpush.bf16.msra.mxu0 %v270
      %294 = vmatmul.bf16.gmra.mxu0 %v217
      %v295 = vpop.f32.mrf.mxu0
      %v296 = vadd.f32 %v236, %v295
      %v297 = vpop.f32.mrf.mxu0
      %298 = vdwg.mxu0
      %299 = vst [vmem:[%s216] sm:$0xff] %v296
      %p300 = scmp.lt.s32.totalorder %s19, 1
      %s301 = scalar_select %p300, %s19, 1
      %p302 = scmp.lt.s32.totalorder %s18, 0
      %s303 = scalar_select %p302, %s18, 0
      %s304 = sadd.s32 %s303, %s301
      %s305 = smul.addr %s304, 8
      %s306 = scalar_lea.vmem %s3, %s305
      // Predicated region
      $region33: #{multi_head_self_attention.5} parent=31 // pred_check
        %p307 = pneg %p124
      $region34: #{multi_head_self_attention.5} parent=31 // pred_check_branch
        %309 = sbr.rel (%p307) target = $region36
      $region35: #{multi_head_self_attention.5} parent=31 // pred_region
        _
      $region36: #{multi_head_self_attention.5} parent=31 // pred_fallthru
        _
    $region32: #{multi_head_self_attention.5} parent=5 // pred_fallthru
      _
    %p310 = scmp.le.s32.totalorder 2, %s9
    // Predicated region
    $region37: #{multi_head_self_attention.5} parent=5 // pred_check
      %p311 = pneg %p310
    $region38: #{multi_head_self_attention.5} parent=5 // pred_check_branch
      %313 = sbr.rel (%p311) target = $region40
    $region39: #{multi_head_self_attention.5} parent=5 // pred_region
      %s314 = ssub.s32 %s9, 2
      // Predicated region
      $region41: #{multi_head_self_attention.5} parent=39 // pred_check
        %p315 = pneg %p130
      $region42: #{multi_head_self_attention.5} parent=39 // pred_check_branch
        %317 = sbr.rel (%p315) target = $region44
      $region43: #{multi_head_self_attention.5} parent=39 // pred_region
        %p318 = scmp.lt.s32.totalorder %s21, 1
        %s319 = scalar_select %p318, %s21, 1
        %p320 = scmp.lt.s32.totalorder %s20, 0
        %s321 = scalar_select %p320, %s20, 0
        %s322 = sadd.s32 %s321, %s319
        %s323 = smul.addr %s322, 8
        %s324 = scalar_lea.vmem %s3, %s323
      $region44: #{multi_head_self_attention.5} parent=39 // pred_fallthru
        _
    $region40: #{multi_head_self_attention.5} parent=5 // pred_fallthru
      _
  $region6: #{multi_head_self_attention.5} parent=0 // loop_footer
    %s13 = sadd.s32 1, %s9
  $region7: #{multi_head_self_attention.5} parent=0 // loop_footer_branch
    %8 = sbr.rel target = $region3
  $region8: #{multi_head_self_attention.5} parent=0 // loop_exit
    _

</llo_original>
